<compile_context>
chip_gen: v7x
topology: tpu7x:2x2x1
jax: 0.10.0
libtpu: 0.0.40
codegen_flags: <defaults>
</compile_context>

<pallas_src>
import functools
import math

import jax
import jax.numpy as jnp
from jax import lax
from jax.experimental import pallas as pl
from jax.experimental.pallas import tpu as pltpu


# ---------------------------------------------------------------------------
# Fused kernel: LayerNorm -> causal multi-head attention -> out_proj -> +res
# ---------------------------------------------------------------------------
def _ln_mha_residual_kernel(x_ref, ln_g_ref, ln_b_ref,
                            wq_ref, wk_ref, wv_ref, wo_ref, bo_ref,
                            o_ref, *, num_heads, eps):
    x = x_ref[0].astype(jnp.float32)               # (S, D), original input
    S, D = x.shape
    hd = D // num_heads
    inv_sqrt_hd = 1.0 / math.sqrt(hd)

    # --- LayerNormalization (biased variance, eps inside sqrt) ---
    mean = jnp.mean(x, axis=-1, keepdims=True)
    var = jnp.mean((x - mean) ** 2, axis=-1, keepdims=True)
    h = (x - mean) / jnp.sqrt(var + eps)
    h = h * ln_g_ref[...].astype(jnp.float32) + ln_b_ref[...].astype(jnp.float32)

    # --- Q / K / V projections on the MXU (weights stored as (d_in, d_out)) ---
    q = jnp.dot(h, wq_ref[...].astype(jnp.float32), preferred_element_type=jnp.float32)
    k = jnp.dot(h, wk_ref[...].astype(jnp.float32), preferred_element_type=jnp.float32)
    v = jnp.dot(h, wv_ref[...].astype(jnp.float32), preferred_element_type=jnp.float32)

    # Causal mask indices (strictly-upper triangle masked, diagonal kept).
    row = lax.broadcasted_iota(jnp.int32, (S, S), 0)
    col = lax.broadcasted_iota(jnp.int32, (S, S), 1)
    neg_inf = jnp.float32(-jnp.inf)

    # Per-head attention; the output projection is accumulated head-by-head,
    #   out = sum_h ctx_h @ Wo^T[h*hd:(h+1)*hd, :]
    # so the per-head contexts never need to be concatenated.
    acc = jnp.zeros((S, D), dtype=jnp.float32)
    for hi in range(num_heads):
        lo = hi * hd
        qh = q[:, lo:lo + hd]                      # (S, hd)
        kh = k[:, lo:lo + hd]
        vh = v[:, lo:lo + hd]
        # scores = qh @ kh^T (contract last dims, no materialized transpose)
        sc = lax.dot_general(qh, kh, (((1,), (1,)), ((), ())),
                             preferred_element_type=jnp.float32)
        sc = sc * inv_sqrt_hd
        sc = jnp.where(col > row, neg_inf, sc)
        m = jnp.max(sc, axis=-1, keepdims=True)
        p = jnp.exp(sc - m)
        w = p / jnp.sum(p, axis=-1, keepdims=True)  # softmax (dropout == id)
        ctx_h = jnp.dot(w, vh, preferred_element_type=jnp.float32)   # (S, hd)
        acc = acc + jnp.dot(ctx_h, wo_ref[lo:lo + hd, :].astype(jnp.float32),
                            preferred_element_type=jnp.float32)

    out = acc + bo_ref[...].astype(jnp.float32)     # out_proj bias
    # drop_shortcut == identity (eval mode); residual add with original x.
    o_ref[0] = (out + x).astype(o_ref.dtype)


def ln_mha_residual_pallas(x, ln_scale, ln_shift, wq, wk, wv, wo, bo, *,
                           num_heads, eps=1e-5):
    """One fused sub-block: LN -> causal MHA -> out_proj -> + residual."""
    B, S, D = x.shape
    kernel = functools.partial(_ln_mha_residual_kernel,
                               num_heads=num_heads, eps=eps)
    as_row = lambda a: a.reshape(1, -1)
    fixed = lambda b: (0, 0)                       # weights resident across grid
    return pl.pallas_call(
        kernel,
        out_shape=jax.ShapeDtypeStruct((B, S, D), x.dtype),
        grid_spec=pltpu.PrefetchScalarGridSpec(
            num_scalar_prefetch=0,
            grid=(B,),
            in_specs=[
                pl.BlockSpec((1, S, D), lambda b: (b, 0, 0)),   # x (one batch/step)
                pl.BlockSpec((1, D), fixed),                    # LN scale
                pl.BlockSpec((1, D), fixed),                    # LN shift
                pl.BlockSpec((D, D), fixed),                    # Wq^T
                pl.BlockSpec((D, D), fixed),                    # Wk^T
                pl.BlockSpec((D, D), fixed),                    # Wv^T
                pl.BlockSpec((D, D), fixed),                    # Wo^T
                pl.BlockSpec((1, D), fixed),                    # out_proj bias
            ],
            out_specs=pl.BlockSpec((1, S, D), lambda b: (b, 0, 0)),
        ),
        compiler_params=pltpu.CompilerParams(
            dimension_semantics=("parallel",),
        ),
    )(x, as_row(ln_scale), as_row(ln_shift), wq, wk, wv, wo, as_row(bo))


def transformer_block_pallas(x, params, *, num_heads, eps=1e-5):
    """Full TransformerBlock.forward as written in the PyTorch module."""
    o1 = ln_mha_residual_pallas(
        x, params["ln1_scale"], params["ln1_shift"],
        params["wq"], params["wk"], params["wv"], params["wo"], params["bo"],
        num_heads=num_heads, eps=eps)
    # Second sub-block: the module calls self.att again (NOT self.ff),
    # re-using the same attention weights.
    o2 = ln_mha_residual_pallas(
        o1, params["ln2_scale"], params["ln2_shift"],
        params["wq"], params["wk"], params["wv"], params["wo"], params["bo"],
        num_heads=num_heads, eps=eps)
    return o2


# ---------------------------------------------------------------------------
# Fused FeedForward kernel: Linear(D->4D) -> tanh-GELU (epilogue) -> Linear
# (Defined by the module; TransformerBlock.forward never calls it — provided
#  and tested separately per the performance review.)
# ---------------------------------------------------------------------------
def _ffn_gelu_kernel(x_ref, w1_ref, b1_ref, w2_ref, b2_ref, o_ref):
    x = x_ref[...].astype(jnp.float32)              # (TM, D)
    h = jnp.dot(x, w1_ref[...].astype(jnp.float32),
                preferred_element_type=jnp.float32)
    h = h + b1_ref[...].astype(jnp.float32)
    # tanh-GELU exactly as written in the module (coefficient 0.0044715),
    # fused into the up-projection epilogue — never written to HBM.
    c = jnp.float32(math.sqrt(2.0 / math.pi))
    h = 0.5 * h * (1.0 + jnp.tanh(c * (h + jnp.float32(0.0044715) * (h * h * h))))
    out = jnp.dot(h, w2_ref[...].astype(jnp.float32),
                  preferred_element_type=jnp.float32)
    o_ref[...] = (out + b2_ref[...].astype(jnp.float32)).astype(o_ref.dtype)


def feed_forward_pallas(x, w1, b1, w2, b2, *, tile_m=512):
    B, S, D = x.shape
    H = w1.shape[1]
    M = B * S
    x2 = x.reshape(M, D)
    tm = tile_m if M % tile_m == 0 else M
    out = pl.pallas_call(
        _ffn_gelu_kernel,
        out_shape=jax.ShapeDtypeStruct((M, D), x.dtype),
        grid_spec=pltpu.PrefetchScalarGridSpec(
            num_scalar_prefetch=0,
            grid=(M // tm,),
            in_specs=[
                pl.BlockSpec((tm, D), lambda i: (i, 0)),
                pl.BlockSpec((D, H), lambda i: (0, 0)),
                pl.BlockSpec((1, H), lambda i: (0, 0)),
                pl.BlockSpec((H, D), lambda i: (0, 0)),
                pl.BlockSpec((1, D), lambda i: (0, 0)),
            ],
            out_specs=pl.BlockSpec((tm, D), lambda i: (i, 0)),
        ),
        compiler_params=pltpu.CompilerParams(
            dimension_semantics=("parallel",),
        ),
    )(x2, w1, b1.reshape(1, H), w2, b2.reshape(1, D))
    return out.reshape(B, S, D)


# ---------------------------------------------------------------------------
# Pure-JAX references (exact-f32 matmuls) for verification
# ---------------------------------------------------------------------------
_HP = dict(precision=lax.Precision.HIGHEST, preferred_element_type=jnp.float32)


def _layer_norm_ref(x, scale, shift, eps=1e-5):
    mean = jnp.mean(x, axis=-1, keepdims=True)
    var = jnp.mean((x - mean) ** 2, axis=-1, keepdims=True)
    return scale * ((x - mean) / jnp.sqrt(var + eps)) + shift


def _mha_ref(x, wq, wk, wv, wo, bo, num_heads):
    B, S, D = x.shape
    hd = D // num_heads

    def proj(w):
        y = jnp.einsum("bsd,de->bse", x, w, **_HP)
        return y.reshape(B, S, num_heads, hd).transpose(0, 2, 1, 3)

    q, k, v = proj(wq), proj(wk), proj(wv)
    sc = jnp.einsum("bhqd,bhkd->bhqk", q, k, **_HP) / math.sqrt(hd)
    mask = jnp.triu(jnp.ones((S, S), dtype=bool), k=1)
    sc = jnp.where(mask, -jnp.inf, sc)
    m = jnp.max(sc, axis=-1, keepdims=True)
    p = jnp.exp(sc - m)
    w = p / jnp.sum(p, axis=-1, keepdims=True)
    ctx = jnp.einsum("bhqk,bhkd->bhqd", w, v, **_HP)
    ctx = ctx.transpose(0, 2, 1, 3).reshape(B, S, D)
    return jnp.einsum("bsd,de->bse", ctx, wo, **_HP) + bo


def transformer_block_ref(x, p, *, num_heads, eps=1e-5):
    h1 = _layer_norm_ref(x, p["ln1_scale"], p["ln1_shift"], eps)
    o1 = _mha_ref(h1, p["wq"], p["wk"], p["wv"], p["wo"], p["bo"], num_heads) + x
    h2 = _layer_norm_ref(o1, p["ln2_scale"], p["ln2_shift"], eps)
    return _mha_ref(h2, p["wq"], p["wk"], p["wv"], p["wo"], p["bo"], num_heads) + o1


def feed_forward_ref(x, w1, b1, w2, b2):
    h = jnp.einsum("bsd,dh->bsh", x, w1, **_HP) + b1
    c = math.sqrt(2.0 / math.pi)
    h = 0.5 * h * (1.0 + jnp.tanh(c * (h + 0.0044715 * jnp.power(h, 3))))
    return jnp.einsum("bsh,hd->bsd", h, w2, **_HP) + b2


if __name__ == "__main__":
    # Small config consistent with the module:
    #   batch=2, context_length(seq)=8, embed_dim=32, n_heads=4, drop_rate=0.0
    B, S, D, NH = 2, 8, 32, 4
    HID = 4 * D
    wscale = 1.0 / math.sqrt(D)

    key = jax.random.PRNGKey(0)
    ks = jax.random.split(key, 16)
    x = jax.random.normal(ks[0], (B, S, D), dtype=jnp.float32)

    params = {
        "ln1_scale": 1.0 + 0.1 * jax.random.normal(ks[1], (D,), jnp.float32),
        "ln1_shift": 0.1 * jax.random.normal(ks[2], (D,), jnp.float32),
        "ln2_scale": 1.0 + 0.1 * jax.random.normal(ks[3], (D,), jnp.float32),
        "ln2_shift": 0.1 * jax.random.normal(ks[4], (D,), jnp.float32),
        # Attention weights, stored as (d_in, d_out) == (PyTorch nn.Linear W)^T
        "wq": wscale * jax.random.normal(ks[5], (D, D), jnp.float32),
        "wk": wscale * jax.random.normal(ks[6], (D, D), jnp.float32),
        "wv": wscale * jax.random.normal(ks[7], (D, D), jnp.float32),
        "wo": wscale * jax.random.normal(ks[8], (D, D), jnp.float32),
        "bo": 0.1 * jax.random.normal(ks[9], (D,), jnp.float32),
        # FeedForward weights (module defines them; forward never calls self.ff)
        "w1": wscale * jax.random.normal(ks[10], (D, HID), jnp.float32),
        "b1": 0.1 * jax.random.normal(ks[11], (HID,), jnp.float32),
        "w2": (1.0 / math.sqrt(HID)) * jax.random.normal(ks[12], (HID, D), jnp.float32),
        "b2": 0.1 * jax.random.normal(ks[13], (D,), jnp.float32),
    }

    # --- TransformerBlock forward via fused Pallas kernels ---
    out = transformer_block_pallas(x, params, num_heads=NH)
    out = jax.block_until_ready(out)
    ref = transformer_block_ref(x, params, num_heads=NH)
    assert out.shape == x.shape and out.dtype == x.dtype
    err = float(jnp.max(jnp.abs(out - ref)))
    assert err < 1e-4, f"TransformerBlock mismatch: max abs err {err}"

    # --- Fused Linear -> GELU(epilogue) -> Linear (module's FeedForward) ---
    ff_out = feed_forward_pallas(x, params["w1"], params["b1"],
                                 params["w2"], params["b2"])
    ff_out = jax.block_until_ready(ff_out)
    ff_ref = feed_forward_ref(x, params["w1"], params["b1"],
                              params["w2"], params["b2"])
    ff_err = float(jnp.max(jnp.abs(ff_out - ff_ref)))
    assert ff_err < 1e-4, f"FeedForward mismatch: max abs err {ff_err}"

    print("KERNEL_OK")
</pallas_src>

<mosaic_0001>
module attributes {stable_mosaic.version = 11 : i64} {
  func.func @_ln_mha_residual_kernel(%arg0: i32, %arg1: memref<1x8x32xf32, #tpu.memory_space<vmem>>, %arg2: memref<1x32xf32, #tpu.memory_space<vmem>>, %arg3: memref<1x32xf32, #tpu.memory_space<vmem>>, %arg4: memref<32x32xf32, #tpu.memory_space<vmem>>, %arg5: memref<32x32xf32, #tpu.memory_space<vmem>>, %arg6: memref<32x32xf32, #tpu.memory_space<vmem>>, %arg7: memref<32x32xf32, #tpu.memory_space<vmem>>, %arg8: memref<1x32xf32, #tpu.memory_space<vmem>>, %arg9: memref<1x8x32xf32, #tpu.memory_space<vmem>>) attributes {dimension_semantics = [#tpu.dimension_semantics<parallel>], iteration_bounds = array<i64: 2>, scalar_prefetch = 0 : i64, scratch_operands = 0 : i64, tpu.core_type = #tpu.core_type<tc>, window_params = [{transform_indices = @transform_0, window_bounds = array<i64: 1, 8, 32>}, {pipeline_mode = #tpu.pipeline_mode<synchronous>, transform_indices = @transform_1, window_bounds = array<i64: 1, 32>}, {pipeline_mode = #tpu.pipeline_mode<synchronous>, transform_indices = @transform_2, window_bounds = array<i64: 1, 32>}, {pipeline_mode = #tpu.pipeline_mode<synchronous>, transform_indices = @transform_3, window_bounds = array<i64: 32, 32>}, {pipeline_mode = #tpu.pipeline_mode<synchronous>, transform_indices = @transform_4, window_bounds = array<i64: 32, 32>}, {pipeline_mode = #tpu.pipeline_mode<synchronous>, transform_indices = @transform_5, window_bounds = array<i64: 32, 32>}, {pipeline_mode = #tpu.pipeline_mode<synchronous>, transform_indices = @transform_6, window_bounds = array<i64: 32, 32>}, {pipeline_mode = #tpu.pipeline_mode<synchronous>, transform_indices = @transform_7, window_bounds = array<i64: 1, 32>}, {transform_indices = @transform_8, window_bounds = array<i64: 1, 8, 32>}]} {
    %c0 = arith.constant 0 : index
    %c0_0 = arith.constant 0 : index
    %c0_1 = arith.constant 0 : index
    %0 = vector.load %arg1[%c0, %c0_0, %c0_1] : memref<1x8x32xf32, #tpu.memory_space<vmem>>, vector<1x8x32xf32>
    %1 = vector.shape_cast %0 : vector<1x8x32xf32> to vector<8x32xf32>
    %cst = arith.constant dense<0.000000e+00> : vector<8xf32>
    %2 = vector.multi_reduction <add>, %1, %cst [1] : vector<8x32xf32> to vector<8xf32>
    %3 = vector.shape_cast %2 : vector<8xf32> to vector<8x1xf32>
    %cst_2 = arith.constant 3.200000e+01 : f32
    %4 = vector.broadcast %cst_2 : f32 to vector<8x1xf32>
    %5 = arith.divf %3, %4 : vector<8x1xf32>
    %6 = vector.broadcast %5 : vector<8x1xf32> to vector<8x32xf32>
    %7 = arith.subf %1, %6 : vector<8x32xf32>
    %8 = arith.mulf %7, %7 : vector<8x32xf32>
    %cst_3 = arith.constant dense<0.000000e+00> : vector<8xf32>
    %9 = vector.multi_reduction <add>, %8, %cst_3 [1] : vector<8x32xf32> to vector<8xf32>
    %10 = vector.shape_cast %9 : vector<8xf32> to vector<8x1xf32>
    %cst_4 = arith.constant 3.200000e+01 : f32
    %11 = vector.broadcast %cst_4 : f32 to vector<8x1xf32>
    %12 = arith.divf %10, %11 : vector<8x1xf32>
    %13 = vector.broadcast %5 : vector<8x1xf32> to vector<8x32xf32>
    %14 = arith.subf %1, %13 : vector<8x32xf32>
    %cst_5 = arith.constant 9.99999974E-6 : f32
    %15 = vector.broadcast %cst_5 : f32 to vector<8x1xf32>
    %16 = arith.addf %12, %15 : vector<8x1xf32>
    %17 = math.sqrt %16 : vector<8x1xf32>
    %18 = vector.broadcast %17 : vector<8x1xf32> to vector<8x32xf32>
    %19 = arith.divf %14, %18 : vector<8x32xf32>
    %c0_6 = arith.constant 0 : index
    %c0_7 = arith.constant 0 : index
    %20 = vector.load %arg2[%c0_6, %c0_7] : memref<1x32xf32, #tpu.memory_space<vmem>>, vector<1x32xf32>
    %21 = vector.broadcast %20 : vector<1x32xf32> to vector<8x32xf32>
    %22 = arith.mulf %19, %21 : vector<8x32xf32>
    %c0_8 = arith.constant 0 : index
    %c0_9 = arith.constant 0 : index
    %23 = vector.load %arg3[%c0_8, %c0_9] : memref<1x32xf32, #tpu.memory_space<vmem>>, vector<1x32xf32>
    %24 = vector.broadcast %23 : vector<1x32xf32> to vector<8x32xf32>
    %25 = arith.addf %22, %24 : vector<8x32xf32>
    %c0_10 = arith.constant 0 : index
    %c0_11 = arith.constant 0 : index
    %26 = vector.load %arg4[%c0_10, %c0_11] : memref<32x32xf32, #tpu.memory_space<vmem>>, vector<32x32xf32>
    %cst_12 = arith.constant dense<0.000000e+00> : vector<8x32xf32>
    %27 = tpu.matmul %25, %26, %cst_12 {dimension_numbers = #tpu.dot_dimension_numbers<[1], [0], [0], [1], [0, 0, 1, 1], [], []>} : vector<8x32xf32>, vector<32x32xf32>, vector<8x32xf32> -> vector<8x32xf32>
    %c0_13 = arith.constant 0 : index
    %c0_14 = arith.constant 0 : index
    %28 = vector.load %arg5[%c0_13, %c0_14] : memref<32x32xf32, #tpu.memory_space<vmem>>, vector<32x32xf32>
    %cst_15 = arith.constant dense<0.000000e+00> : vector<8x32xf32>
    %29 = tpu.matmul %25, %28, %cst_15 {dimension_numbers = #tpu.dot_dimension_numbers<[1], [0], [0], [1], [0, 0, 1, 1], [], []>} : vector<8x32xf32>, vector<32x32xf32>, vector<8x32xf32> -> vector<8x32xf32>
    %c0_16 = arith.constant 0 : index
    %c0_17 = arith.constant 0 : index
    %30 = vector.load %arg6[%c0_16, %c0_17] : memref<32x32xf32, #tpu.memory_space<vmem>>, vector<32x32xf32>
    %cst_18 = arith.constant dense<0.000000e+00> : vector<8x32xf32>
    %31 = tpu.matmul %25, %30, %cst_18 {dimension_numbers = #tpu.dot_dimension_numbers<[1], [0], [0], [1], [0, 0, 1, 1], [], []>} : vector<8x32xf32>, vector<32x32xf32>, vector<8x32xf32> -> vector<8x32xf32>
    %32 = tpu.iota {dimensions = array<i32: 0>} : vector<8x8xi32>
    %33 = tpu.iota {dimensions = array<i32: 1>} : vector<8x8xi32>
    %cst_19 = arith.constant 0.000000e+00 : f32
    %34 = vector.broadcast %cst_19 : f32 to vector<8x32xf32>
    %35 = vector.extract_strided_slice %27 {offsets = [0, 0], sizes = [8, 8], strides = [1, 1]} : vector<8x32xf32> to vector<8x8xf32>
    %36 = vector.extract_strided_slice %29 {offsets = [0, 0], sizes = [8, 8], strides = [1, 1]} : vector<8x32xf32> to vector<8x8xf32>
    %37 = vector.extract_strided_slice %31 {offsets = [0, 0], sizes = [8, 8], strides = [1, 1]} : vector<8x32xf32> to vector<8x8xf32>
    %cst_20 = arith.constant dense<0.000000e+00> : vector<8x8xf32>
    %38 = tpu.matmul %35, %36, %cst_20 {dimension_numbers = #tpu.dot_dimension_numbers<[1], [1], [0], [0], [0, 0, 1, 0], [], []>} : vector<8x8xf32>, vector<8x8xf32>, vector<8x8xf32> -> vector<8x8xf32>
    %cst_21 = arith.constant 0.353553385 : f32
    %39 = vector.broadcast %cst_21 : f32 to vector<8x8xf32>
    %40 = arith.mulf %38, %39 : vector<8x8xf32>
    %41 = arith.cmpi sgt, %33, %32 : vector<8x8xi32>
    %cst_22 = arith.constant 0xFF800000 : f32
    %42 = vector.broadcast %cst_22 : f32 to vector<8x8xf32>
    %43 = arith.select %41, %42, %40 : vector<8x8xi1>, vector<8x8xf32>
    %cst_23 = arith.constant dense<0xFF800000> : vector<8xf32>
    %44 = vector.multi_reduction <maximumf>, %43, %cst_23 [1] : vector<8x8xf32> to vector<8xf32>
    %45 = vector.shape_cast %44 : vector<8xf32> to vector<8x1xf32>
    %46 = vector.broadcast %45 : vector<8x1xf32> to vector<8x8xf32>
    %47 = arith.subf %43, %46 : vector<8x8xf32>
    %48 = math.exp %47 : vector<8x8xf32>
    %cst_24 = arith.constant dense<0.000000e+00> : vector<8xf32>
    %49 = vector.multi_reduction <add>, %48, %cst_24 [1] : vector<8x8xf32> to vector<8xf32>
    %50 = vector.shape_cast %49 : vector<8xf32> to vector<8x1xf32>
    %51 = vector.broadcast %50 : vector<8x1xf32> to vector<8x8xf32>
    %52 = arith.divf %48, %51 : vector<8x8xf32>
    %cst_25 = arith.constant dense<0.000000e+00> : vector<8x8xf32>
    %53 = tpu.matmul %52, %37, %cst_25 {dimension_numbers = #tpu.dot_dimension_numbers<[1], [0], [0], [1], [0, 0, 1, 1], [], []>} : vector<8x8xf32>, vector<8x8xf32>, vector<8x8xf32> -> vector<8x8xf32>
    %c0_26 = arith.constant 0 : index
    %c0_27 = arith.constant 0 : index
    %54 = vector.load %arg7[%c0_26, %c0_27] : memref<32x32xf32, #tpu.memory_space<vmem>>, vector<8x32xf32>
    %cst_28 = arith.constant dense<0.000000e+00> : vector<8x32xf32>
    %55 = tpu.matmul %53, %54, %cst_28 {dimension_numbers = #tpu.dot_dimension_numbers<[1], [0], [0], [1], [0, 0, 1, 1], [], []>} : vector<8x8xf32>, vector<8x32xf32>, vector<8x32xf32> -> vector<8x32xf32>
    %56 = arith.addf %34, %55 : vector<8x32xf32>
    %57 = vector.extract_strided_slice %27 {offsets = [0, 8], sizes = [8, 8], strides = [1, 1]} : vector<8x32xf32> to vector<8x8xf32>
    %58 = vector.extract_strided_slice %29 {offsets = [0, 8], sizes = [8, 8], strides = [1, 1]} : vector<8x32xf32> to vector<8x8xf32>
    %59 = vector.extract_strided_slice %31 {offsets = [0, 8], sizes = [8, 8], strides = [1, 1]} : vector<8x32xf32> to vector<8x8xf32>
    %cst_29 = arith.constant dense<0.000000e+00> : vector<8x8xf32>
    %60 = tpu.matmul %57, %58, %cst_29 {dimension_numbers = #tpu.dot_dimension_numbers<[1], [1], [0], [0], [0, 0, 1, 0], [], []>} : vector<8x8xf32>, vector<8x8xf32>, vector<8x8xf32> -> vector<8x8xf32>
    %cst_30 = arith.constant 0.353553385 : f32
    %61 = vector.broadcast %cst_30 : f32 to vector<8x8xf32>
    %62 = arith.mulf %60, %61 : vector<8x8xf32>
    %63 = arith.cmpi sgt, %33, %32 : vector<8x8xi32>
    %cst_31 = arith.constant 0xFF800000 : f32
    %64 = vector.broadcast %cst_31 : f32 to vector<8x8xf32>
    %65 = arith.select %63, %64, %62 : vector<8x8xi1>, vector<8x8xf32>
    %cst_32 = arith.constant dense<0xFF800000> : vector<8xf32>
    %66 = vector.multi_reduction <maximumf>, %65, %cst_32 [1] : vector<8x8xf32> to vector<8xf32>
    %67 = vector.shape_cast %66 : vector<8xf32> to vector<8x1xf32>
    %68 = vector.broadcast %67 : vector<8x1xf32> to vector<8x8xf32>
    %69 = arith.subf %65, %68 : vector<8x8xf32>
    %70 = math.exp %69 : vector<8x8xf32>
    %cst_33 = arith.constant dense<0.000000e+00> : vector<8xf32>
    %71 = vector.multi_reduction <add>, %70, %cst_33 [1] : vector<8x8xf32> to vector<8xf32>
    %72 = vector.shape_cast %71 : vector<8xf32> to vector<8x1xf32>
    %73 = vector.broadcast %72 : vector<8x1xf32> to vector<8x8xf32>
    %74 = arith.divf %70, %73 : vector<8x8xf32>
    %cst_34 = arith.constant dense<0.000000e+00> : vector<8x8xf32>
    %75 = tpu.matmul %74, %59, %cst_34 {dimension_numbers = #tpu.dot_dimension_numbers<[1], [0], [0], [1], [0, 0, 1, 1], [], []>} : vector<8x8xf32>, vector<8x8xf32>, vector<8x8xf32> -> vector<8x8xf32>
    %c8 = arith.constant 8 : index
    %c0_35 = arith.constant 0 : index
    %76 = vector.load %arg7[%c8, %c0_35] : memref<32x32xf32, #tpu.memory_space<vmem>>, vector<8x32xf32>
    %cst_36 = arith.constant dense<0.000000e+00> : vector<8x32xf32>
    %77 = tpu.matmul %75, %76, %cst_36 {dimension_numbers = #tpu.dot_dimension_numbers<[1], [0], [0], [1], [0, 0, 1, 1], [], []>} : vector<8x8xf32>, vector<8x32xf32>, vector<8x32xf32> -> vector<8x32xf32>
    %78 = arith.addf %56, %77 : vector<8x32xf32>
    %79 = vector.extract_strided_slice %27 {offsets = [0, 16], sizes = [8, 8], strides = [1, 1]} : vector<8x32xf32> to vector<8x8xf32>
    %80 = vector.extract_strided_slice %29 {offsets = [0, 16], sizes = [8, 8], strides = [1, 1]} : vector<8x32xf32> to vector<8x8xf32>
    %81 = vector.extract_strided_slice %31 {offsets = [0, 16], sizes = [8, 8], strides = [1, 1]} : vector<8x32xf32> to vector<8x8xf32>
    %cst_37 = arith.constant dense<0.000000e+00> : vector<8x8xf32>
    %82 = tpu.matmul %79, %80, %cst_37 {dimension_numbers = #tpu.dot_dimension_numbers<[1], [1], [0], [0], [0, 0, 1, 0], [], []>} : vector<8x8xf32>, vector<8x8xf32>, vector<8x8xf32> -> vector<8x8xf32>
    %cst_38 = arith.constant 0.353553385 : f32
    %83 = vector.broadcast %cst_38 : f32 to vector<8x8xf32>
    %84 = arith.mulf %82, %83 : vector<8x8xf32>
    %85 = arith.cmpi sgt, %33, %32 : vector<8x8xi32>
    %cst_39 = arith.constant 0xFF800000 : f32
    %86 = vector.broadcast %cst_39 : f32 to vector<8x8xf32>
    %87 = arith.select %85, %86, %84 : vector<8x8xi1>, vector<8x8xf32>
    %cst_40 = arith.constant dense<0xFF800000> : vector<8xf32>
    %88 = vector.multi_reduction <maximumf>, %87, %cst_40 [1] : vector<8x8xf32> to vector<8xf32>
    %89 = vector.shape_cast %88 : vector<8xf32> to vector<8x1xf32>
    %90 = vector.broadcast %89 : vector<8x1xf32> to vector<8x8xf32>
    %91 = arith.subf %87, %90 : vector<8x8xf32>
    %92 = math.exp %91 : vector<8x8xf32>
    %cst_41 = arith.constant dense<0.000000e+00> : vector<8xf32>
    %93 = vector.multi_reduction <add>, %92, %cst_41 [1] : vector<8x8xf32> to vector<8xf32>
    %94 = vector.shape_cast %93 : vector<8xf32> to vector<8x1xf32>
    %95 = vector.broadcast %94 : vector<8x1xf32> to vector<8x8xf32>
    %96 = arith.divf %92, %95 : vector<8x8xf32>
    %cst_42 = arith.constant dense<0.000000e+00> : vector<8x8xf32>
    %97 = tpu.matmul %96, %81, %cst_42 {dimension_numbers = #tpu.dot_dimension_numbers<[1], [0], [0], [1], [0, 0, 1, 1], [], []>} : vector<8x8xf32>, vector<8x8xf32>, vector<8x8xf32> -> vector<8x8xf32>
    %c16 = arith.constant 16 : index
    %c0_43 = arith.constant 0 : index
    %98 = vector.load %arg7[%c16, %c0_43] : memref<32x32xf32, #tpu.memory_space<vmem>>, vector<8x32xf32>
    %cst_44 = arith.constant dense<0.000000e+00> : vector<8x32xf32>
    %99 = tpu.matmul %97, %98, %cst_44 {dimension_numbers = #tpu.dot_dimension_numbers<[1], [0], [0], [1], [0, 0, 1, 1], [], []>} : vector<8x8xf32>, vector<8x32xf32>, vector<8x32xf32> -> vector<8x32xf32>
    %100 = arith.addf %78, %99 : vector<8x32xf32>
    %101 = vector.extract_strided_slice %27 {offsets = [0, 24], sizes = [8, 8], strides = [1, 1]} : vector<8x32xf32> to vector<8x8xf32>
    %102 = vector.extract_strided_slice %29 {offsets = [0, 24], sizes = [8, 8], strides = [1, 1]} : vector<8x32xf32> to vector<8x8xf32>
    %103 = vector.extract_strided_slice %31 {offsets = [0, 24], sizes = [8, 8], strides = [1, 1]} : vector<8x32xf32> to vector<8x8xf32>
    %cst_45 = arith.constant dense<0.000000e+00> : vector<8x8xf32>
    %104 = tpu.matmul %101, %102, %cst_45 {dimension_numbers = #tpu.dot_dimension_numbers<[1], [1], [0], [0], [0, 0, 1, 0], [], []>} : vector<8x8xf32>, vector<8x8xf32>, vector<8x8xf32> -> vector<8x8xf32>
    %cst_46 = arith.constant 0.353553385 : f32
    %105 = vector.broadcast %cst_46 : f32 to vector<8x8xf32>
    %106 = arith.mulf %104, %105 : vector<8x8xf32>
    %107 = arith.cmpi sgt, %33, %32 : vector<8x8xi32>
    %cst_47 = arith.constant 0xFF800000 : f32
    %108 = vector.broadcast %cst_47 : f32 to vector<8x8xf32>
    %109 = arith.select %107, %108, %106 : vector<8x8xi1>, vector<8x8xf32>
    %cst_48 = arith.constant dense<0xFF800000> : vector<8xf32>
    %110 = vector.multi_reduction <maximumf>, %109, %cst_48 [1] : vector<8x8xf32> to vector<8xf32>
    %111 = vector.shape_cast %110 : vector<8xf32> to vector<8x1xf32>
    %112 = vector.broadcast %111 : vector<8x1xf32> to vector<8x8xf32>
    %113 = arith.subf %109, %112 : vector<8x8xf32>
    %114 = math.exp %113 : vector<8x8xf32>
    %cst_49 = arith.constant dense<0.000000e+00> : vector<8xf32>
    %115 = vector.multi_reduction <add>, %114, %cst_49 [1] : vector<8x8xf32> to vector<8xf32>
    %116 = vector.shape_cast %115 : vector<8xf32> to vector<8x1xf32>
    %117 = vector.broadcast %116 : vector<8x1xf32> to vector<8x8xf32>
    %118 = arith.divf %114, %117 : vector<8x8xf32>
    %cst_50 = arith.constant dense<0.000000e+00> : vector<8x8xf32>
    %119 = tpu.matmul %118, %103, %cst_50 {dimension_numbers = #tpu.dot_dimension_numbers<[1], [0], [0], [1], [0, 0, 1, 1], [], []>} : vector<8x8xf32>, vector<8x8xf32>, vector<8x8xf32> -> vector<8x8xf32>
    %c24 = arith.constant 24 : index
    %c0_51 = arith.constant 0 : index
    %120 = vector.load %arg7[%c24, %c0_51] : memref<32x32xf32, #tpu.memory_space<vmem>>, vector<8x32xf32>
    %cst_52 = arith.constant dense<0.000000e+00> : vector<8x32xf32>
    %121 = tpu.matmul %119, %120, %cst_52 {dimension_numbers = #tpu.dot_dimension_numbers<[1], [0], [0], [1], [0, 0, 1, 1], [], []>} : vector<8x8xf32>, vector<8x32xf32>, vector<8x32xf32> -> vector<8x32xf32>
    %122 = arith.addf %100, %121 : vector<8x32xf32>
    %c0_53 = arith.constant 0 : index
    %c0_54 = arith.constant 0 : index
    %123 = vector.load %arg8[%c0_53, %c0_54] : memref<1x32xf32, #tpu.memory_space<vmem>>, vector<1x32xf32>
    %124 = vector.broadcast %123 : vector<1x32xf32> to vector<8x32xf32>
    %125 = arith.addf %122, %124 : vector<8x32xf32>
    %126 = arith.addf %125, %1 : vector<8x32xf32>
    %c0_55 = arith.constant 0 : index
    %c0_56 = arith.constant 0 : index
    %c0_57 = arith.constant 0 : index
    %127 = vector.load %arg9[%c0_55, %c0_56, %c0_57] : memref<1x8x32xf32, #tpu.memory_space<vmem>>, vector<1x8x32xf32>
    %128 = vector.shape_cast %127 : vector<1x8x32xf32> to vector<8x32xf32>
    %129 = vector.shape_cast %126 : vector<8x32xf32> to vector<1x8x32xf32>
    tpu.vector_store %arg9[%c0_55, %c0_56, %c0_57], %129 {strides = array<i32>} : memref<1x8x32xf32, #tpu.memory_space<vmem>>, vector<1x8x32xf32>,
    return
  }
  func.func @transform_0(%arg0: i32) -> (i32, i32, i32) {
    %c0_i32 = arith.constant 0 : i32
    %c0_i32_0 = arith.constant 0 : i32
    %c0_i32_1 = arith.constant 0 : i32
    return %arg0, %c0_i32, %c0_i32_0 : i32, i32, i32
  }
  func.func @transform_1(%arg0: i32) -> (i32, i32) {
    %c0_i32 = arith.constant 0 : i32
    %c0_i32_0 = arith.constant 0 : i32
    %c0_i32_1 = arith.constant 0 : i32
    return %c0_i32, %c0_i32_0 : i32, i32
  }
  func.func @transform_2(%arg0: i32) -> (i32, i32) {
    %c0_i32 = arith.constant 0 : i32
    %c0_i32_0 = arith.constant 0 : i32
    %c0_i32_1 = arith.constant 0 : i32
    return %c0_i32, %c0_i32_0 : i32, i32
  }
  func.func @transform_3(%arg0: i32) -> (i32, i32) {
    %c0_i32 = arith.constant 0 : i32
    %c0_i32_0 = arith.constant 0 : i32
    %c0_i32_1 = arith.constant 0 : i32
    return %c0_i32, %c0_i32_0 : i32, i32
  }
  func.func @transform_4(%arg0: i32) -> (i32, i32) {
    %c0_i32 = arith.constant 0 : i32
    %c0_i32_0 = arith.constant 0 : i32
    %c0_i32_1 = arith.constant 0 : i32
    return %c0_i32, %c0_i32_0 : i32, i32
  }
  func.func @transform_5(%arg0: i32) -> (i32, i32) {
    %c0_i32 = arith.constant 0 : i32
    %c0_i32_0 = arith.constant 0 : i32
    %c0_i32_1 = arith.constant 0 : i32
    return %c0_i32, %c0_i32_0 : i32, i32
  }
  func.func @transform_6(%arg0: i32) -> (i32, i32) {
    %c0_i32 = arith.constant 0 : i32
    %c0_i32_0 = arith.constant 0 : i32
    %c0_i32_1 = arith.constant 0 : i32
    return %c0_i32, %c0_i32_0 : i32, i32
  }
  func.func @transform_7(%arg0: i32) -> (i32, i32) {
    %c0_i32 = arith.constant 0 : i32
    %c0_i32_0 = arith.constant 0 : i32
    %c0_i32_1 = arith.constant 0 : i32
    return %c0_i32, %c0_i32_0 : i32, i32
  }
  func.func @transform_8(%arg0: i32) -> (i32, i32, i32) {
    %c0_i32 = arith.constant 0 : i32
    %c0_i32_0 = arith.constant 0 : i32
    %c0_i32_1 = arith.constant 0 : i32
    return %arg0, %c0_i32, %c0_i32_0 : i32, i32, i32
  }
}

</mosaic_0001>

<llo_original>
// kernel: tpu_custom_call.1
$region0: #{tpu_custom_call.1}
  #allocation0 [shape = 'u32[]', space=smem, size = 0x4, offset = 0x4, fixed_abs, tag = 'smem constant byte address 0x4 - core index']
  #allocation1 [shape = 'u32[144,128]{1,0:T(1,128)}', space=vmem, size = 0x12000, scoped, tag = 'internal scratch']
  %s0 = inlined_call_operand.hbm [shape: f32[2,8,32], index: 0, kind: input, shape index: {}]
  %s1 = inlined_call_operand.vmem [shape: f32[1,32], index: 1, kind: input, shape index: {}]
  %s2 = inlined_call_operand.vmem [shape: f32[1,32], index: 2, kind: input, shape index: {}]
  %s3 = inlined_call_operand.hbm [shape: f32[32,32], index: 3, kind: input, shape index: {}]
  %s4 = inlined_call_operand.hbm [shape: f32[32,32], index: 4, kind: input, shape index: {}]
  %s5 = inlined_call_operand.hbm [shape: f32[32,32], index: 5, kind: input, shape index: {}]
  %s6 = inlined_call_operand.hbm [shape: f32[32,32], index: 6, kind: input, shape index: {}]
  %s7 = inlined_call_operand.vmem [shape: f32[1,32], index: 7, kind: input, shape index: {}]
  %s8 = inlined_call_operand.hbm [shape: f32[2,8,32], index: 8, kind: output, shape index: {}]
  %s9 = sld [smem:[#allocation0]]
  $region85: #{tpu_custom_call.1} parent=0
    _
  %s11 = ssub.s32 1, %s9
  %s12 = scalar_select 0, %s11, %s9
  $region1: #{tpu_custom_call.1} parent=0
    #allocation2 [shape = 'u8[8192]{0}', space=vmem, size = 0x2000, scoped, tag = 'input window, operand 0']
    #allocation3 [shape = 's32[2]{0}', space=sflag, size = 0x8, scoped, tag = 'scoped memory for tpu_custom_call.1']
    #allocation4 [shape = 's32[2]{0}', space=sflag, size = 0x8, scoped, tag = 'scoped memory for tpu_custom_call.1']
    #allocation5 [shape = 'u8[16384]{0}', space=vmem, size = 0x4000, scoped, tag = 'input window, operand 3, single buffered']
    #allocation6 [shape = 's32[1]{0}', space=sflag, size = 0x4, scoped, tag = 'scoped memory for tpu_custom_call.1']
    #allocation7 [shape = 'u8[16384]{0}', space=vmem, size = 0x4000, scoped, tag = 'input window, operand 4, single buffered']
    #allocation8 [shape = 'u8[16384]{0}', space=vmem, size = 0x4000, scoped, tag = 'input window, operand 5, single buffered']
    #allocation9 [shape = 's32[1]{0}', space=sflag, size = 0x4, scoped, tag = 'scoped memory for tpu_custom_call.1']
    #allocation10 [shape = 'u8[16384]{0}', space=vmem, size = 0x4000, scoped, tag = 'input window, operand 6, single buffered']
    #allocation11 [shape = 'u8[8192]{0}', space=vmem, size = 0x2000, scoped, tag = 'output window, operand 0']
    %13 = vsyncpa [#allocation3], 0
    %s14 = scalar_lea.sflag [#allocation3], 1
    %15 = vsyncpa %s14, 0
    %16 = vsyncpa [#allocation6], 0
    %17 = vsyncpa [#allocation9], 0
    %18 = vsyncpa [#allocation4], 0
    %s19 = scalar_lea.sflag [#allocation4], 1
    %20 = vsyncpa %s19, 0
    loop: start=0, step=1, limit=4
    $region2: #{tpu_custom_call.1} parent=1 // loop_pre_header
      _
    $region3: #{tpu_custom_call.1} parent=1 // loop_header
      %s22 = sphi 0, %s26
      %p23 = scmp.ge.s32.totalorder %s22, 4
      %s32 = sphi 0, %s34
      %s35 = sphi 0, %s32
      %s36 = sphi 0, %s35
      %s52 = sphi 0, %s36
      %s56 = sphi 0, %s56
      %s58 = sphi 0, %s56
      %s59 = sphi 0, %s58
      %s73 = sphi 0, %s59
      %s77 = sphi 0, %s77
      %s79 = sphi 0, %s77
      %s80 = sphi 0, %s79
      %s94 = sphi 0, %s80
      %s98 = sphi 0, %s98
      %s100 = sphi 0, %s98
      %s101 = sphi 0, %s100
      %s115 = sphi 0, %s101
      %s119 = sphi 0, %s119
      %s121 = sphi 0, %s119
      %s122 = sphi 0, %s121
      %s136 = sphi 0, %s122
      %s140 = sphi 0, %s140
      %s142 = sphi 0, %s140
      %s143 = sphi 0, %s142
      %s157 = sphi 0, %s143
      %s161 = sphi 0, %s161
      %s163 = sphi 0, %s161
      %s164 = sphi 0, %s163
      %s178 = sphi 0, %s164
      %s182 = sphi 0, %s182
      %s184 = sphi 0, %s182
      %s185 = sphi 0, %s184
      %s199 = sphi 0, %s185
      %s205 = sphi 0, %s207
      %s208 = sphi 0, %s205
      %s209 = sphi 0, %s208
      %s225 = sphi 0, %s209
    $region4: #{tpu_custom_call.1} parent=1 // loop_header_branch
      %25 = sbr.rel (%p23) target = $region8
    $region5: #{tpu_custom_call.1} parent=1 // loop_body
      %s27 = ssub.s32 %s22, 1
      %s28 = ssub.s32 %s22, 2
      %s29 = sadd.s32 %s22, 1
      %s30 = ssub.s32 %s22, %s29
      %p31 = scmp.eq.s32.totalorder %s30, 0
      %s33 = sadd.s32 %s32, 1
      %s34 = scalar_select %p31, %s32, %s33
      %p37 = pneg %p31
      %p38 = scmp.eq.s32.totalorder %s22, 1
      %p39 = por %p37, %p38
      %p40 = scmp.ne.s32.totalorder %s32, %s35
      %p41 = scmp.eq.s32.totalorder %s22, 0
      %p42 = por %p40, %p41
      %p43 = scmp.ne.s32.totalorder %s32, %s35
      %p44 = scmp.eq.s32.totalorder %s27, 1
      %p45 = por %p43, %p44
      %p46 = scmp.ne.s32.totalorder %s35, %s36
      %p47 = scmp.eq.s32.totalorder %s27, 0
      %p48 = por %p46, %p47
      %p49 = scmp.ne.s32.totalorder %s35, %s36
      %p50 = scmp.eq.s32.totalorder %s28, 1
      %p51 = por %p49, %p50
      %p53 = scmp.ne.s32.totalorder %s36, %s52
      %p54 = scmp.eq.s32.totalorder %s28, 0
      %p55 = por %p53, %p54
      %s57 = sadd.s32 %s56, 1
      %p60 = scmp.eq.s32.totalorder %s22, 1
      %p61 = scmp.ne.s32.totalorder %s56, %s58
      %p62 = scmp.eq.s32.totalorder %s22, 0
      %p63 = por %p61, %p62
      %p64 = scmp.ne.s32.totalorder %s56, %s58
      %p65 = scmp.eq.s32.totalorder %s27, 1
      %p66 = por %p64, %p65
      %p67 = scmp.ne.s32.totalorder %s58, %s59
      %p68 = scmp.eq.s32.totalorder %s27, 0
      %p69 = por %p67, %p68
      %p70 = scmp.ne.s32.totalorder %s58, %s59
      %p71 = scmp.eq.s32.totalorder %s28, 1
      %p72 = por %p70, %p71
      %p74 = scmp.ne.s32.totalorder %s59, %s73
      %p75 = scmp.eq.s32.totalorder %s28, 0
      %p76 = por %p74, %p75
      %s78 = sadd.s32 %s77, 1
      %p81 = scmp.eq.s32.totalorder %s22, 1
      %p82 = scmp.ne.s32.totalorder %s77, %s79
      %p83 = scmp.eq.s32.totalorder %s22, 0
      %p84 = por %p82, %p83
      %p85 = scmp.ne.s32.totalorder %s77, %s79
      %p86 = scmp.eq.s32.totalorder %s27, 1
      %p87 = por %p85, %p86
      %p88 = scmp.ne.s32.totalorder %s79, %s80
      %p89 = scmp.eq.s32.totalorder %s27, 0
      %p90 = por %p88, %p89
      %p91 = scmp.ne.s32.totalorder %s79, %s80
      %p92 = scmp.eq.s32.totalorder %s28, 1
      %p93 = por %p91, %p92
      %p95 = scmp.ne.s32.totalorder %s80, %s94
      %p96 = scmp.eq.s32.totalorder %s28, 0
      %p97 = por %p95, %p96
      %s99 = sadd.s32 %s98, 1
      %p102 = scmp.eq.s32.totalorder %s22, 1
      %p103 = scmp.ne.s32.totalorder %s98, %s100
      %p104 = scmp.eq.s32.totalorder %s22, 0
      %p105 = por %p103, %p104
      %p106 = scmp.ne.s32.totalorder %s98, %s100
      %p107 = scmp.eq.s32.totalorder %s27, 1
      %p108 = por %p106, %p107
      %p109 = scmp.ne.s32.totalorder %s100, %s101
      %p110 = scmp.eq.s32.totalorder %s27, 0
      %p111 = por %p109, %p110
      %p112 = scmp.ne.s32.totalorder %s100, %s101
      %p113 = scmp.eq.s32.totalorder %s28, 1
      %p114 = por %p112, %p113
      %p116 = scmp.ne.s32.totalorder %s101, %s115
      %p117 = scmp.eq.s32.totalorder %s28, 0
      %p118 = por %p116, %p117
      %s120 = sadd.s32 %s119, 1
      %p123 = scmp.eq.s32.totalorder %s22, 1
      %p124 = scmp.ne.s32.totalorder %s119, %s121
      %p125 = scmp.eq.s32.totalorder %s22, 0
      %p126 = por %p124, %p125
      %p127 = scmp.ne.s32.totalorder %s119, %s121
      %p128 = scmp.eq.s32.totalorder %s27, 1
      %p129 = por %p127, %p128
      %p130 = scmp.ne.s32.totalorder %s121, %s122
      %p131 = scmp.eq.s32.totalorder %s27, 0
      %p132 = por %p130, %p131
      %p133 = scmp.ne.s32.totalorder %s121, %s122
      %p134 = scmp.eq.s32.totalorder %s28, 1
      %p135 = por %p133, %p134
      %p137 = scmp.ne.s32.totalorder %s122, %s136
      %p138 = scmp.eq.s32.totalorder %s28, 0
      %p139 = por %p137, %p138
      %s141 = sadd.s32 %s140, 1
      %p144 = scmp.eq.s32.totalorder %s22, 1
      %p145 = scmp.ne.s32.totalorder %s140, %s142
      %p146 = scmp.eq.s32.totalorder %s22, 0
      %p147 = por %p145, %p146
      %p148 = scmp.ne.s32.totalorder %s140, %s142
      %p149 = scmp.eq.s32.totalorder %s27, 1
      %p150 = por %p148, %p149
      %p151 = scmp.ne.s32.totalorder %s142, %s143
      %p152 = scmp.eq.s32.totalorder %s27, 0
      %p153 = por %p151, %p152
      %p154 = scmp.ne.s32.totalorder %s142, %s143
      %p155 = scmp.eq.s32.totalorder %s28, 1
      %p156 = por %p154, %p155
      %p158 = scmp.ne.s32.totalorder %s143, %s157
      %p159 = scmp.eq.s32.totalorder %s28, 0
      %p160 = por %p158, %p159
      %s162 = sadd.s32 %s161, 1
      %p165 = scmp.eq.s32.totalorder %s22, 1
      %p166 = scmp.ne.s32.totalorder %s161, %s163
      %p167 = scmp.eq.s32.totalorder %s22, 0
      %p168 = por %p166, %p167
      %p169 = scmp.ne.s32.totalorder %s161, %s163
      %p170 = scmp.eq.s32.totalorder %s27, 1
      %p171 = por %p169, %p170
      %p172 = scmp.ne.s32.totalorder %s163, %s164
      %p173 = scmp.eq.s32.totalorder %s27, 0
      %p174 = por %p172, %p173
      %p175 = scmp.ne.s32.totalorder %s163, %s164
      %p176 = scmp.eq.s32.totalorder %s28, 1
      %p177 = por %p175, %p176
      %p179 = scmp.ne.s32.totalorder %s164, %s178
      %p180 = scmp.eq.s32.totalorder %s28, 0
      %p181 = por %p179, %p180
      %s183 = sadd.s32 %s182, 1
      %p186 = scmp.eq.s32.totalorder %s22, 1
      %p187 = scmp.ne.s32.totalorder %s182, %s184
      %p188 = scmp.eq.s32.totalorder %s22, 0
      %p189 = por %p187, %p188
      %p190 = scmp.ne.s32.totalorder %s182, %s184
      %p191 = scmp.eq.s32.totalorder %s27, 1
      %p192 = por %p190, %p191
      %p193 = scmp.ne.s32.totalorder %s184, %s185
      %p194 = scmp.eq.s32.totalorder %s27, 0
      %p195 = por %p193, %p194
      %p196 = scmp.ne.s32.totalorder %s184, %s185
      %p197 = scmp.eq.s32.totalorder %s28, 1
      %p198 = por %p196, %p197
      %p200 = scmp.ne.s32.totalorder %s185, %s199
      %p201 = scmp.eq.s32.totalorder %s28, 0
      %p202 = por %p200, %p201
      %s203 = ssub.s32 %s22, %s29
      %p204 = scmp.eq.s32.totalorder %s203, 0
      %s206 = sadd.s32 %s205, 1
      %s207 = scalar_select %p204, %s205, %s206
      %p210 = pneg %p204
      %p211 = scmp.eq.s32.totalorder %s22, 1
      %p212 = por %p210, %p211
      %p213 = scmp.ne.s32.totalorder %s205, %s208
      %p214 = scmp.eq.s32.totalorder %s22, 0
      %p215 = por %p213, %p214
      %p216 = scmp.ne.s32.totalorder %s205, %s208
      %p217 = scmp.eq.s32.totalorder %s27, 1
      %p218 = por %p216, %p217
      %p219 = scmp.ne.s32.totalorder %s208, %s209
      %p220 = scmp.eq.s32.totalorder %s27, 0
      %p221 = por %p219, %p220
      %p222 = scmp.ne.s32.totalorder %s208, %s209
      %p223 = scmp.eq.s32.totalorder %s28, 1
      %p224 = por %p222, %p223
      %p226 = scmp.ne.s32.totalorder %s209, %s225
      %p227 = scmp.eq.s32.totalorder %s28, 0
      %p228 = por %p226, %p227
      %p229 = scmp.le.s32.totalorder 1, %s22
      %p230 = scmp.lt.s32.totalorder %s22, 3
      %p231 = pnand %p229, %p230
      %p232 = pneg %p231
      // Predicated region
      $region9: #{tpu_custom_call.1} parent=5 // pred_check
        _
      $region10: #{tpu_custom_call.1} parent=5 // pred_check_branch
        %234 = sbr.rel (%p231) target = $region12
      $region11: #{tpu_custom_call.1} parent=5 // pred_region
        %s235 = ssub.s32 %s22, 1
        // Predicated region
        $region13: #{tpu_custom_call.1} parent=11 // pred_check
          %p236 = pneg %p69
        $region14: #{tpu_custom_call.1} parent=11 // pred_check_branch
          %238 = sbr.rel (%p236) target = $region16
        $region15: #{tpu_custom_call.1} parent=11 // pred_region
          _
        $region16: #{tpu_custom_call.1} parent=11 // pred_fallthru
          _
        // Predicated region
        $region17: #{tpu_custom_call.1} parent=11 // pred_check
          %p239 = pneg %p90
        $region18: #{tpu_custom_call.1} parent=11 // pred_check_branch
          %241 = sbr.rel (%p239) target = $region20
        $region19: #{tpu_custom_call.1} parent=11 // pred_region
          _
        $region20: #{tpu_custom_call.1} parent=11 // pred_fallthru
          _
        // Predicated region
        $region21: #{tpu_custom_call.1} parent=11 // pred_check
          %p242 = pneg %p111
        $region22: #{tpu_custom_call.1} parent=11 // pred_check_branch
          %244 = sbr.rel (%p242) target = $region24
        $region23: #{tpu_custom_call.1} parent=11 // pred_region
          %s246 = ssub.s32 512, 512
          %247 = vsyncadd [#allocation6], %s246
          %s248 = sshll.u32 [#allocation5], 4
          %s249 = int_to_ptr.vmem [resolvable:$true] %s248
          %254 = dma.hbm_to_vmem [thread:$0]  %s3, 512, %s249, [#allocation6], 128, 128, 8
        $region24: #{tpu_custom_call.1} parent=11 // pred_fallthru
          _
        // Predicated region
        $region25: #{tpu_custom_call.1} parent=11 // pred_check
          %p255 = pneg %p132
        $region26: #{tpu_custom_call.1} parent=11 // pred_check_branch
          %257 = sbr.rel (%p255) target = $region28
        $region27: #{tpu_custom_call.1} parent=11 // pred_region
          %s259 = ssub.s32 512, 512
          %260 = vsyncadd [#allocation6], %s259
          %s261 = sshll.u32 [#allocation7], 4
          %s262 = int_to_ptr.vmem [resolvable:$true] %s261
          %267 = dma.hbm_to_vmem [thread:$0]  %s4, 512, %s262, [#allocation6], 128, 128, 8
        $region28: #{tpu_custom_call.1} parent=11 // pred_fallthru
          _
        // Predicated region
        $region29: #{tpu_custom_call.1} parent=11 // pred_check
          %p268 = pneg %p153
        $region30: #{tpu_custom_call.1} parent=11 // pred_check_branch
          %270 = sbr.rel (%p268) target = $region32
        $region31: #{tpu_custom_call.1} parent=11 // pred_region
          %s272 = ssub.s32 512, 512
          %273 = vsyncadd [#allocation9], %s272
          %s274 = sshll.u32 [#allocation8], 4
          %s275 = int_to_ptr.vmem [resolvable:$true] %s274
          %280 = dma.hbm_to_vmem [thread:$0]  %s5, 512, %s275, [#allocation9], 128, 128, 8
        $region32: #{tpu_custom_call.1} parent=11 // pred_fallthru
          _
        // Predicated region
        $region33: #{tpu_custom_call.1} parent=11 // pred_check
          %p281 = pneg %p174
        $region34: #{tpu_custom_call.1} parent=11 // pred_check_branch
          %283 = sbr.rel (%p281) target = $region36
        $region35: #{tpu_custom_call.1} parent=11 // pred_region
          %s285 = ssub.s32 512, 512
          %286 = vsyncadd [#allocation9], %s285
          %s287 = sshll.u32 [#allocation10], 4
          %s288 = int_to_ptr.vmem [resolvable:$true] %s287
          %293 = dma.hbm_to_vmem [thread:$0]  %s6, 512, %s288, [#allocation9], 128, 128, 8
        $region36: #{tpu_custom_call.1} parent=11 // pred_fallthru
          _
        // Predicated region
        $region37: #{tpu_custom_call.1} parent=11 // pred_check
          %p294 = pneg %p195
        $region38: #{tpu_custom_call.1} parent=11 // pred_check_branch
          %296 = sbr.rel (%p294) target = $region40
        $region39: #{tpu_custom_call.1} parent=11 // pred_region
          _
        $region40: #{tpu_custom_call.1} parent=11 // pred_fallthru
          _
      $region12: #{tpu_custom_call.1} parent=5 // pred_fallthru
        _
      %p297 = scmp.lt.s32.totalorder %s22, 2
      // Predicated region
      $region41: #{tpu_custom_call.1} parent=5 // pred_check
        %p298 = pneg %p297
      $region42: #{tpu_custom_call.1} parent=5 // pred_check_branch
        %300 = sbr.rel (%p298) target = $region44
      $region43: #{tpu_custom_call.1} parent=5 // pred_region
        // Predicated region
        $region45: #{tpu_custom_call.1} parent=43 // pred_check
          %p301 = pneg %p42
        $region46: #{tpu_custom_call.1} parent=43 // pred_check_branch
          %303 = sbr.rel (%p301) target = $region48
        $region47: #{tpu_custom_call.1} parent=43 // pred_region
          %s304 = sand.u32 %s32, 1
          %s305 = scalar_lea.sflag [#allocation3], %s304
          %s306 = sand.u32 %s32, 1
          %s307 = smul.addr %s306, 8
          %s308 = scalar_lea.vmem [#allocation2], %s307
          %s310 = ssub.s32 128, 128
          %311 = vsyncadd %s305, %s310
          %s312 = smul.addr %s22, 128
          %s313 = scalar_lea.hbm %s0, %s312
          %s315 = sshll.u32 %s308, 4
          %s316 = int_to_ptr.vmem [resolvable:$true] %s315
          %318 = dma.hbm_to_vmem [thread:$0]  %s313, 128, %s316, %s305
        $region48: #{tpu_custom_call.1} parent=43 // pred_fallthru
          _
      $region44: #{tpu_custom_call.1} parent=5 // pred_fallthru
        _
      %p319 = scmp.le.s32.totalorder 1, %s22
      %p320 = scmp.lt.s32.totalorder %s22, 3
      %p321 = pnand %p319, %p320
      %p322 = pneg %p321
      // Predicated region
      $region49: #{tpu_custom_call.1} parent=5 // pred_check
        _
      $region50: #{tpu_custom_call.1} parent=5 // pred_check_branch
        %324 = sbr.rel (%p321) target = $region52
      $region51: #{tpu_custom_call.1} parent=5 // pred_region
        %s325 = ssub.s32 %s22, 1
        %s326 = sand.u32 %s35, 1
        %s327 = scalar_lea.sflag [#allocation3], %s326
        %s328 = sand.u32 %s35, 1
        %s329 = smul.addr %s328, 8
        %s330 = scalar_lea.vmem [#allocation2], %s329
        // Predicated region
        $region53: #{tpu_custom_call.1} parent=51 // pred_check
          %p331 = pneg %p48
        $region54: #{tpu_custom_call.1} parent=51 // pred_check_branch
          %333 = sbr.rel (%p331) target = $region56
        $region55: #{tpu_custom_call.1} parent=51 // pred_region
          %334 = dma.done %s327, 128
        $region56: #{tpu_custom_call.1} parent=51 // pred_fallthru
          _
        // Predicated region
        $region57: #{tpu_custom_call.1} parent=51 // pred_check
          %p335 = pneg %p111
        $region58: #{tpu_custom_call.1} parent=51 // pred_check_branch
          %337 = sbr.rel (%p335) target = $region60
        $region59: #{tpu_custom_call.1} parent=51 // pred_region
          %338 = dma.done [#allocation6], 512
        $region60: #{tpu_custom_call.1} parent=51 // pred_fallthru
          _
        // Predicated region
        $region61: #{tpu_custom_call.1} parent=51 // pred_check
          %p339 = pneg %p132
        $region62: #{tpu_custom_call.1} parent=51 // pred_check_branch
          %341 = sbr.rel (%p339) target = $region64
        $region63: #{tpu_custom_call.1} parent=51 // pred_region
          %342 = dma.done [#allocation6], 512
        $region64: #{tpu_custom_call.1} parent=51 // pred_fallthru
          _
        // Predicated region
        $region65: #{tpu_custom_call.1} parent=51 // pred_check
          %p343 = pneg %p153
        $region66: #{tpu_custom_call.1} parent=51 // pred_check_branch
          %345 = sbr.rel (%p343) target = $region68
        $region67: #{tpu_custom_call.1} parent=51 // pred_region
          %346 = dma.done [#allocation9], 512
        $region68: #{tpu_custom_call.1} parent=51 // pred_fallthru
          _
        // Predicated region
        $region69: #{tpu_custom_call.1} parent=51 // pred_check
          %p347 = pneg %p174
        $region70: #{tpu_custom_call.1} parent=51 // pred_check_branch
          %349 = sbr.rel (%p347) target = $region72
        $region71: #{tpu_custom_call.1} parent=51 // pred_region
          %350 = dma.done [#allocation9], 512
        $region72: #{tpu_custom_call.1} parent=51 // pred_fallthru
          _
        %s351 = sand.u32 %s35, 1
        %s352 = scalar_lea.sflag [#allocation3], %s351
        %s353 = sand.u32 %s35, 1
        %s354 = smul.addr %s353, 8
        %s355 = scalar_lea.vmem [#allocation2], %s354
        %p356 = pneg %p48
        %p357 = pneg %p45
        %p358 = pneg %p69
        %p359 = pneg %p66
        %p360 = pneg %p90
        %p361 = pneg %p87
        %p362 = pneg %p111
        %p363 = pneg %p108
        %p364 = pneg %p132
        %p365 = pneg %p129
        %p366 = pneg %p153
        %p367 = pneg %p150
        %p368 = pneg %p174
        %p369 = pneg %p171
        %p370 = pneg %p195
        %p371 = pneg %p192
        %p372 = pneg %p221
        %p373 = pneg %p218
        %s374 = sand.u32 %s208, 1
        %s375 = scalar_lea.sflag [#allocation4], %s374
        %s376 = sand.u32 %s208, 1
        %s377 = smul.addr %s376, 8
        %s378 = scalar_lea.vmem [#allocation11], %s377
        %v379 = vld [vmem:[%s330] sm:$0xff]
        %vm380 = vcmask 261120
        %v381 = vsel %vm380, %v379, 0.0
        %382 = vadd.xlane.f32.xlu0 %v381
        %v383 = vpop.xlane.xlu0 %382
        %v384 = vrcp.pop 32.0
        %v385 = vmul.f32 %v383, %v384
        %v386 = vsub.f32 %v379, %v385
        %v387 = vmul.f32 %v386, %v386
        %v388 = vsel %vm380, %v387, 0.0
        %389 = vadd.xlane.f32.xlu0 %v388
        %v390 = vpop.xlane.xlu0 %389
        %v391 = vmul.f32 %v390, %v384
        %v392 = vadd.f32 %v391, 1e-05
        %v393 = vrsqrt.pop %v392
        %v394 = vmul.f32 %v392, %v393
        %vm395 = vcmp.eq.f32.partialorder %v392, inf
        %v396 = vsel %vm395, %v392, %v394
        %vm397 = vcmp.eq.f32.partialorder %v392, 0.0
        %v398 = vand.u32 %v392, 2147483648
        %v399 = vsel %vm397, %v398, %v396
        %v400 = vrcp.pop %v399
        %v401 = vmul.f32 %v386, %v400
        %v402 = vld [vmem:[%s1] sm:$0x1]
        %v404 = vlaneseq
        %v405 = vshrl.u32 %v404, 7
        %v406 = vsub.s32 0, %v405
        %v407 = vrot.slane %v402, %v406
        %v409 = vmul.f32 %v401, %v407
        %v410 = vld [vmem:[%s2] sm:$0x1]
        %v412 = vlaneseq
        %v413 = vshrl.u32 %v412, 7
        %v414 = vsub.s32 0, %v413
        %v415 = vrot.slane %v410, %v414
        %v417 = vadd.f32 %v409, %v415
        %v418 = vld [vmem:[#allocation5] sm:$0xff]
        %v419 = vld [vmem:[#allocation5 + $0x8] sm:$0xff]
        %v420 = vld [vmem:[#allocation5 + $0x10] sm:$0xff]
        %v421 = vld [vmem:[#allocation5 + $0x18] sm:$0xff]
        %v423 = vsel %vm380, %v417, 0
        %425 = vmatprep.subr.mxu0 0.0
        %426 = vmatpush1.msra.mxu0 %v418
        %427 = vmatprep.subr.mxu0 0.0
        %428 = vmatpush1.msra.mxu0 %v419
        %429 = vmatprep.subr.mxu0 0.0
        %430 = vmatpush1.msra.mxu0 %v420
        %431 = vmatprep.subr.mxu0 0.0
        %432 = vmatpush1.msra.mxu0 %v421
        %433 = vmatprep.subr.mxu0 0.0
        %434 = vmatpush1.msra.mxu0 0.0
        %435 = vmatprep.subr.mxu0 0.0
        %436 = vmatpush1.msra.mxu0 0.0
        %437 = vmatprep.subr.mxu0 0.0
        %438 = vmatpush1.msra.mxu0 0.0
        %439 = vmatprep.subr.mxu0 0.0
        %440 = vmatpush1.msra.mxu0 0.0
        %441 = vmatprep.subr.mxu0 0.0
        %442 = vmatpush1.msra.mxu0 0.0
        %443 = vmatprep.subr.mxu0 0.0
        %444 = vmatpush1.msra.mxu0 0.0
        %445 = vmatprep.subr.mxu0 0.0
        %446 = vmatpush1.msra.mxu0 0.0
        %447 = vmatprep.subr.mxu0 0.0
        %448 = vmatpush1.msra.mxu0 0.0
        %449 = vmatprep.subr.mxu0 0.0
        %450 = vmatpush1.msra.mxu0 0.0
        %451 = vmatprep.subr.mxu0 0.0
        %452 = vmatpush1.msra.mxu0 0.0
        %453 = vmatprep.subr.mxu0 0.0
        %454 = vmatpush1.msra.mxu0 0.0
        %455 = vmatprep.subr.mxu0 0.0
        %456 = vmatpush1.msra.mxu0 0.0
        %457 = vmatprep.subr.mxu0 0.0
        %458 = vmatpush1.msra.mxu0 0.0
        %459 = vmatprep.subr.mxu0 0.0
        %460 = vmatpush1.msra.mxu0 0.0
        %461 = vmatprep.subr.mxu0 0.0
        %462 = vmatpush1.msra.mxu0 0.0
        %463 = vmatprep.subr.mxu0 0.0
        %464 = vmatpush1.msra.mxu0 0.0
        %465 = vmatprep.subr.mxu0 0.0
        %466 = vmatpush1.msra.mxu0 0.0
        %467 = vmatprep.subr.mxu0 0.0
        %468 = vmatpush1.msra.mxu0 0.0
        %469 = vmatprep.subr.mxu0 0.0
        %470 = vmatpush1.msra.mxu0 0.0
        %471 = vmatprep.subr.mxu0 0.0
        %472 = vmatpush1.msra.mxu0 0.0
        %473 = vmatprep.subr.mxu0 0.0
        %474 = vmatpush1.msra.mxu0 0.0
        %475 = vmatprep.subr.mxu0 0.0
        %476 = vmatpush1.msra.mxu0 0.0
        %477 = vmatprep.subr.mxu0 0.0
        %478 = vmatpush1.msra.mxu0 0.0
        %479 = vmatprep.subr.mxu0 0.0
        %480 = vmatpush1.msra.mxu0 0.0
        %481 = vmatprep.subr.mxu0 0.0
        %482 = vmatpush1.msra.mxu0 0.0
        %483 = vmatprep.subr.mxu0 0.0
        %484 = vmatpush1.msra.mxu0 0.0
        %485 = vmatprep.subr.mxu0 0.0
        %486 = vmatpush1.msra.mxu0 0.0
        %487 = vmatprep.subr.mxu0 0.0
        %488 = vmatpush1.msra.mxu0 0.0
        %489 = vmatprep.mubr.f32.mxu0 0.0
        %490 = vmatmul.mubr.f32.gmra.mrb[0].mxu0 %v423
        %v491 = vpop.f32.mrb[0].mxu0
        %v492 = vadd.f32 0.0, %v491
        %v493 = vpop.f32.mrb[0].mxu0
        %494 = vdwg.mxu0
        %v495 = vld [vmem:[#allocation7] sm:$0xff]
        %v496 = vld [vmem:[#allocation7 + $0x8] sm:$0xff]
        %v497 = vld [vmem:[#allocation7 + $0x10] sm:$0xff]
        %v498 = vld [vmem:[#allocation7 + $0x18] sm:$0xff]
        %499 = vmatprep.subr.mxu0 0.0
        %500 = vmatpush1.msra.mxu0 %v495
        %501 = vmatprep.subr.mxu0 0.0
        %502 = vmatpush1.msra.mxu0 %v496
        %503 = vmatprep.subr.mxu0 0.0
        %504 = vmatpush1.msra.mxu0 %v497
        %505 = vmatprep.subr.mxu0 0.0
        %506 = vmatpush1.msra.mxu0 %v498
        %507 = vmatprep.subr.mxu0 0.0
        %508 = vmatpush1.msra.mxu0 0.0
        %509 = vmatprep.subr.mxu0 0.0
        %510 = vmatpush1.msra.mxu0 0.0
        %511 = vmatprep.subr.mxu0 0.0
        %512 = vmatpush1.msra.mxu0 0.0
        %513 = vmatprep.subr.mxu0 0.0
        %514 = vmatpush1.msra.mxu0 0.0
        %515 = vmatprep.subr.mxu0 0.0
        %516 = vmatpush1.msra.mxu0 0.0
        %517 = vmatprep.subr.mxu0 0.0
        %518 = vmatpush1.msra.mxu0 0.0
        %519 = vmatprep.subr.mxu0 0.0
        %520 = vmatpush1.msra.mxu0 0.0
        %521 = vmatprep.subr.mxu0 0.0
        %522 = vmatpush1.msra.mxu0 0.0
        %523 = vmatprep.subr.mxu0 0.0
        %524 = vmatpush1.msra.mxu0 0.0
        %525 = vmatprep.subr.mxu0 0.0
        %526 = vmatpush1.msra.mxu0 0.0
        %527 = vmatprep.subr.mxu0 0.0
        %528 = vmatpush1.msra.mxu0 0.0
        %529 = vmatprep.subr.mxu0 0.0
        %530 = vmatpush1.msra.mxu0 0.0
        %531 = vmatprep.subr.mxu0 0.0
        %532 = vmatpush1.msra.mxu0 0.0
        %533 = vmatprep.subr.mxu0 0.0
        %534 = vmatpush1.msra.mxu0 0.0
        %535 = vmatprep.subr.mxu0 0.0
        %536 = vmatpush1.msra.mxu0 0.0
        %537 = vmatprep.subr.mxu0 0.0
        %538 = vmatpush1.msra.mxu0 0.0
        %539 = vmatprep.subr.mxu0 0.0
        %540 = vmatpush1.msra.mxu0 0.0
        %541 = vmatprep.subr.mxu0 0.0
        %542 = vmatpush1.msra.mxu0 0.0
        %543 = vmatprep.subr.mxu0 0.0
        %544 = vmatpush1.msra.mxu0 0.0
        %545 = vmatprep.subr.mxu0 0.0
        %546 = vmatpush1.msra.mxu0 0.0
        %547 = vmatprep.subr.mxu0 0.0
        %548 = vmatpush1.msra.mxu0 0.0
        %549 = vmatprep.subr.mxu0 0.0
        %550 = vmatpush1.msra.mxu0 0.0
        %551 = vmatprep.subr.mxu0 0.0
        %552 = vmatpush1.msra.mxu0 0.0
        %553 = vmatprep.subr.mxu0 0.0
        %554 = vmatpush1.msra.mxu0 0.0
        %555 = vmatprep.subr.mxu0 0.0
        %556 = vmatpush1.msra.mxu0 0.0
        %557 = vmatprep.subr.mxu0 0.0
        %558 = vmatpush1.msra.mxu0 0.0
        %559 = vmatprep.subr.mxu0 0.0
        %560 = vmatpush1.msra.mxu0 0.0
        %561 = vmatprep.subr.mxu0 0.0
        %562 = vmatpush1.msra.mxu0 0.0
        %563 = vmatprep.mubr.f32.mxu0 0.0
        %564 = vmatmul.mubr.f32.gmra.mrb[0].mxu0 %v423
        %v565 = vpop.f32.mrb[0].mxu0
        %v566 = vadd.f32 0.0, %v565
        %v567 = vpop.f32.mrb[0].mxu0
        %568 = vdwg.mxu0
        %v569 = vld [vmem:[#allocation8] sm:$0xff]
        %v570 = vld [vmem:[#allocation8 + $0x8] sm:$0xff]
        %v571 = vld [vmem:[#allocation8 + $0x10] sm:$0xff]
        %v572 = vld [vmem:[#allocation8 + $0x18] sm:$0xff]
        %573 = vmatprep.subr.mxu0 0.0
        %574 = vmatpush1.msra.mxu0 %v569
        %575 = vmatprep.subr.mxu0 0.0
        %576 = vmatpush1.msra.mxu0 %v570
        %577 = vmatprep.subr.mxu0 0.0
        %578 = vmatpush1.msra.mxu0 %v571
        %579 = vmatprep.subr.mxu0 0.0
        %580 = vmatpush1.msra.mxu0 %v572
        %581 = vmatprep.subr.mxu0 0.0
        %582 = vmatpush1.msra.mxu0 0.0
        %583 = vmatprep.subr.mxu0 0.0
        %584 = vmatpush1.msra.mxu0 0.0
        %585 = vmatprep.subr.mxu0 0.0
        %586 = vmatpush1.msra.mxu0 0.0
        %587 = vmatprep.subr.mxu0 0.0
        %588 = vmatpush1.msra.mxu0 0.0
        %589 = vmatprep.subr.mxu0 0.0
        %590 = vmatpush1.msra.mxu0 0.0
        %591 = vmatprep.subr.mxu0 0.0
        %592 = vmatpush1.msra.mxu0 0.0
        %593 = vmatprep.subr.mxu0 0.0
        %594 = vmatpush1.msra.mxu0 0.0
        %595 = vmatprep.subr.mxu0 0.0
        %596 = vmatpush1.msra.mxu0 0.0
        %597 = vmatprep.subr.mxu0 0.0
        %598 = vmatpush1.msra.mxu0 0.0
        %599 = vmatprep.subr.mxu0 0.0
        %600 = vmatpush1.msra.mxu0 0.0
        %601 = vmatprep.subr.mxu0 0.0
        %602 = vmatpush1.msra.mxu0 0.0
        %603 = vmatprep.subr.mxu0 0.0
        %604 = vmatpush1.msra.mxu0 0.0
        %605 = vmatprep.subr.mxu0 0.0
        %606 = vmatpush1.msra.mxu0 0.0
        %607 = vmatprep.subr.mxu0 0.0
        %608 = vmatpush1.msra.mxu0 0.0
        %609 = vmatprep.subr.mxu0 0.0
        %610 = vmatpush1.msra.mxu0 0.0
        %611 = vmatprep.subr.mxu0 0.0
        %612 = vmatpush1.msra.mxu0 0.0
        %613 = vmatprep.subr.mxu0 0.0
        %614 = vmatpush1.msra.mxu0 0.0
        %615 = vmatprep.subr.mxu0 0.0
        %616 = vmatpush1.msra.mxu0 0.0
        %617 = vmatprep.subr.mxu0 0.0
        %618 = vmatpush1.msra.mxu0 0.0
        %619 = vmatprep.subr.mxu0 0.0
        %620 = vmatpush1.msra.mxu0 0.0
        %621 = vmatprep.subr.mxu0 0.0
        %622 = vmatpush1.msra.mxu0 0.0
        %623 = vmatprep.subr.mxu0 0.0
        %624 = vmatpush1.msra.mxu0 0.0
        %625 = vmatprep.subr.mxu0 0.0
        %626 = vmatpush1.msra.mxu0 0.0
        %627 = vmatprep.subr.mxu0 0.0
        %628 = vmatpush1.msra.mxu0 0.0
        %629 = vmatprep.subr.mxu0 0.0
        %630 = vmatpush1.msra.mxu0 0.0
        %631 = vmatprep.subr.mxu0 0.0
        %632 = vmatpush1.msra.mxu0 0.0
        %633 = vmatprep.subr.mxu0 0.0
        %634 = vmatpush1.msra.mxu0 0.0
        %635 = vmatprep.subr.mxu0 0.0
        %636 = vmatpush1.msra.mxu0 0.0
        %637 = vmatprep.mubr.f32.mxu0 0.0
        %638 = vmatmul.mubr.f32.gmra.mrb[0].mxu0 %v423
        %v639 = vpop.f32.mrb[0].mxu0
        %v640 = vadd.f32 0.0, %v639
        %v641 = vpop.f32.mrb[0].mxu0
        %642 = vdwg.mxu0
        %v643 = vlaneseq
        %v644 = vshrl.u32 %v643, 7
        %v645 = vlaneseq
        %v646 = vand.u32 %v645, 127
        %vm647 = vcmask 64512
        %v649 = vsel %vm647, %v492, 0
        %v652 = vsel %vm647, %v566, 0
        %654 = vmatprep.subr.mxu0 0.0
        %655 = vmatpush1.xpose.msra.mxu0 %v652
        %656 = vmatprep.subr.mxu0 0.0
        %657 = vmatpush1.xpose.msra.mxu0 0.0
        %658 = vmatprep.subr.mxu0 0.0
        %659 = vmatpush1.xpose.msra.mxu0 0.0
        %660 = vmatprep.subr.mxu0 0.0
        %661 = vmatpush1.xpose.msra.mxu0 0.0
        %662 = vmatprep.subr.mxu0 0.0
        %663 = vmatpush1.xpose.msra.mxu0 0.0
        %664 = vmatprep.subr.mxu0 0.0
        %665 = vmatpush1.xpose.msra.mxu0 0.0
        %666 = vmatprep.subr.mxu0 0.0
        %667 = vmatpush1.xpose.msra.mxu0 0.0
        %668 = vmatprep.subr.mxu0 0.0
        %669 = vmatpush1.xpose.msra.mxu0 0.0
        %670 = vmatprep.subr.mxu0 0.0
        %671 = vmatpush1.xpose.msra.mxu0 0.0
        %672 = vmatprep.subr.mxu0 0.0
        %673 = vmatpush1.xpose.msra.mxu0 0.0
        %674 = vmatprep.subr.mxu0 0.0
        %675 = vmatpush1.xpose.msra.mxu0 0.0
        %676 = vmatprep.subr.mxu0 0.0
        %677 = vmatpush1.xpose.msra.mxu0 0.0
        %678 = vmatprep.subr.mxu0 0.0
        %679 = vmatpush1.xpose.msra.mxu0 0.0
        %680 = vmatprep.subr.mxu0 0.0
        %681 = vmatpush1.xpose.msra.mxu0 0.0
        %682 = vmatprep.subr.mxu0 0.0
        %683 = vmatpush1.xpose.msra.mxu0 0.0
        %684 = vmatprep.subr.mxu0 0.0
        %685 = vmatpush1.xpose.msra.mxu0 0.0
        %686 = vmatprep.subr.mxu0 0.0
        %687 = vmatpush1.xpose.msra.mxu0 0.0
        %688 = vmatprep.subr.mxu0 0.0
        %689 = vmatpush1.xpose.msra.mxu0 0.0
        %690 = vmatprep.subr.mxu0 0.0
        %691 = vmatpush1.xpose.msra.mxu0 0.0
        %692 = vmatprep.subr.mxu0 0.0
        %693 = vmatpush1.xpose.msra.mxu0 0.0
        %694 = vmatprep.subr.mxu0 0.0
        %695 = vmatpush1.xpose.msra.mxu0 0.0
        %696 = vmatprep.subr.mxu0 0.0
        %697 = vmatpush1.xpose.msra.mxu0 0.0
        %698 = vmatprep.subr.mxu0 0.0
        %699 = vmatpush1.xpose.msra.mxu0 0.0
        %700 = vmatprep.subr.mxu0 0.0
        %701 = vmatpush1.xpose.msra.mxu0 0.0
        %702 = vmatprep.subr.mxu0 0.0
        %703 = vmatpush1.xpose.msra.mxu0 0.0
        %704 = vmatprep.subr.mxu0 0.0
        %705 = vmatpush1.xpose.msra.mxu0 0.0
        %706 = vmatprep.subr.mxu0 0.0
        %707 = vmatpush1.xpose.msra.mxu0 0.0
        %708 = vmatprep.subr.mxu0 0.0
        %709 = vmatpush1.xpose.msra.mxu0 0.0
        %710 = vmatprep.subr.mxu0 0.0
        %711 = vmatpush1.xpose.msra.mxu0 0.0
        %712 = vmatprep.subr.mxu0 0.0
        %713 = vmatpush1.xpose.msra.mxu0 0.0
        %714 = vmatprep.subr.mxu0 0.0
        %715 = vmatpush1.xpose.msra.mxu0 0.0
        %716 = vmatprep.subr.mxu0 0.0
        %717 = vmatpush1.xpose.msra.mxu0 0.0
        %718 = vmatprep.mubr.f32.mxu0 0.0
        %719 = vmatmul.mubr.f32.gmra.mrb[0].mxu0 %v649
        %v720 = vpop.f32.mrb[0].mxu0
        %v721 = vadd.f32 0.0, %v720
        %v722 = vpop.f32.mrb[0].mxu0
        %723 = vdwg.mxu0
        %v724 = vmul.f32 %v721, 0.35355338
        %vm725 = vcmp.gt.s32.totalorder %v646, %v644
        %v726 = vsel %vm725, -inf, %v724
        %v727 = vsel %vm647, %v726, -inf
        %728 = vmax.xlane.f32.xlu0 %v727
        %v729 = vpop.xlane.xlu0 %728
        %v730 = vsub.f32 %v726, %v729
        %v731 = vmul.f32 %v730, 1.442695
        %v732 = vpow.pop %v731
        %v733 = vsel %vm647, %v732, 0.0
        %734 = vadd.xlane.f32.xlu0 %v733
        %v735 = vpop.xlane.xlu0 %734
        %v736 = vrcp.pop %v735
        %v737 = vmul.f32 %v732, %v736
        %v739 = vsel %vm647, %v737, 0
        %741 = vmatprep.subr.mxu0 0.0
        %742 = vmatpush1.msra.mxu0 %v640
        %743 = vmatprep.subr.mxu0 0.0
        %744 = vmatpush1.msra.mxu0 0.0
        %745 = vmatprep.subr.mxu0 0.0
        %746 = vmatpush1.msra.mxu0 0.0
        %747 = vmatprep.subr.mxu0 0.0
        %748 = vmatpush1.msra.mxu0 0.0
        %749 = vmatprep.subr.mxu0 0.0
        %750 = vmatpush1.msra.mxu0 0.0
        %751 = vmatprep.subr.mxu0 0.0
        %752 = vmatpush1.msra.mxu0 0.0
        %753 = vmatprep.subr.mxu0 0.0
        %754 = vmatpush1.msra.mxu0 0.0
        %755 = vmatprep.subr.mxu0 0.0
        %756 = vmatpush1.msra.mxu0 0.0
        %757 = vmatprep.subr.mxu0 0.0
        %758 = vmatpush1.msra.mxu0 0.0
        %759 = vmatprep.subr.mxu0 0.0
        %760 = vmatpush1.msra.mxu0 0.0
        %761 = vmatprep.subr.mxu0 0.0
        %762 = vmatpush1.msra.mxu0 0.0
        %763 = vmatprep.subr.mxu0 0.0
        %764 = vmatpush1.msra.mxu0 0.0
        %765 = vmatprep.subr.mxu0 0.0
        %766 = vmatpush1.msra.mxu0 0.0
        %767 = vmatprep.subr.mxu0 0.0
        %768 = vmatpush1.msra.mxu0 0.0
        %769 = vmatprep.subr.mxu0 0.0
        %770 = vmatpush1.msra.mxu0 0.0
        %771 = vmatprep.subr.mxu0 0.0
        %772 = vmatpush1.msra.mxu0 0.0
        %773 = vmatprep.subr.mxu0 0.0
        %774 = vmatpush1.msra.mxu0 0.0
        %775 = vmatprep.subr.mxu0 0.0
        %776 = vmatpush1.msra.mxu0 0.0
        %777 = vmatprep.subr.mxu0 0.0
        %778 = vmatpush1.msra.mxu0 0.0
        %779 = vmatprep.subr.mxu0 0.0
        %780 = vmatpush1.msra.mxu0 0.0
        %781 = vmatprep.subr.mxu0 0.0
        %782 = vmatpush1.msra.mxu0 0.0
        %783 = vmatprep.subr.mxu0 0.0
        %784 = vmatpush1.msra.mxu0 0.0
        %785 = vmatprep.subr.mxu0 0.0
        %786 = vmatpush1.msra.mxu0 0.0
        %787 = vmatprep.subr.mxu0 0.0
        %788 = vmatpush1.msra.mxu0 0.0
        %789 = vmatprep.subr.mxu0 0.0
        %790 = vmatpush1.msra.mxu0 0.0
        %791 = vmatprep.subr.mxu0 0.0
        %792 = vmatpush1.msra.mxu0 0.0
        %793 = vmatprep.subr.mxu0 0.0
        %794 = vmatpush1.msra.mxu0 0.0
        %795 = vmatprep.subr.mxu0 0.0
        %796 = vmatpush1.msra.mxu0 0.0
        %797 = vmatprep.subr.mxu0 0.0
        %798 = vmatpush1.msra.mxu0 0.0
        %799 = vmatprep.subr.mxu0 0.0
        %800 = vmatpush1.msra.mxu0 0.0
        %801 = vmatprep.subr.mxu0 0.0
        %802 = vmatpush1.msra.mxu0 0.0
        %803 = vmatprep.subr.mxu0 0.0
        %804 = vmatpush1.msra.mxu0 0.0
        %805 = vmatprep.mubr.f32.mxu0 0.0
        %806 = vmatmul.mubr.f32.gmra.mrb[0].mxu0 %v739
        %v807 = vpop.f32.mrb[0].mxu0
        %v808 = vadd.f32 0.0, %v807
        %v809 = vpop.f32.mrb[0].mxu0
        %810 = vdwg.mxu0
        %v811 = vld [vmem:[#allocation10] sm:$0xff]
        %812 = vrot.lane.b32.xlu0 %v492, 120
        %v813 = vpop.permute.xlu0 %812
        %814 = vrot.lane.b32.xlu0 %v566, 120
        %v815 = vpop.permute.xlu0 %814
        %v816 = vsel %vm647, %v813, 0
        %v818 = vsel %vm647, %v815, 0
        %820 = vmatprep.subr.mxu0 0.0
        %821 = vmatpush1.xpose.msra.mxu0 %v818
        %822 = vmatprep.subr.mxu0 0.0
        %823 = vmatpush1.xpose.msra.mxu0 0.0
        %824 = vmatprep.subr.mxu0 0.0
        %825 = vmatpush1.xpose.msra.mxu0 0.0
        %826 = vmatprep.subr.mxu0 0.0
        %827 = vmatpush1.xpose.msra.mxu0 0.0
        %828 = vmatprep.subr.mxu0 0.0
        %829 = vmatpush1.xpose.msra.mxu0 0.0
        %830 = vmatprep.subr.mxu0 0.0
        %831 = vmatpush1.xpose.msra.mxu0 0.0
        %832 = vmatprep.subr.mxu0 0.0
        %833 = vmatpush1.xpose.msra.mxu0 0.0
        %834 = vmatprep.subr.mxu0 0.0
        %835 = vmatpush1.xpose.msra.mxu0 0.0
        %836 = vmatprep.subr.mxu0 0.0
        %837 = vmatpush1.xpose.msra.mxu0 0.0
        %838 = vmatprep.subr.mxu0 0.0
        %839 = vmatpush1.xpose.msra.mxu0 0.0
        %840 = vmatprep.subr.mxu0 0.0
        %841 = vmatpush1.xpose.msra.mxu0 0.0
        %842 = vmatprep.subr.mxu0 0.0
        %843 = vmatpush1.xpose.msra.mxu0 0.0
        %844 = vmatprep.subr.mxu0 0.0
        %845 = vmatpush1.xpose.msra.mxu0 0.0
        %846 = vmatprep.subr.mxu0 0.0
        %847 = vmatpush1.xpose.msra.mxu0 0.0
        %848 = vmatprep.subr.mxu0 0.0
        %849 = vmatpush1.xpose.msra.mxu0 0.0
        %850 = vmatprep.subr.mxu0 0.0
        %851 = vmatpush1.xpose.msra.mxu0 0.0
        %852 = vmatprep.subr.mxu0 0.0
        %853 = vmatpush1.xpose.msra.mxu0 0.0
        %854 = vmatprep.subr.mxu0 0.0
        %855 = vmatpush1.xpose.msra.mxu0 0.0
        %856 = vmatprep.subr.mxu0 0.0
        %857 = vmatpush1.xpose.msra.mxu0 0.0
        %858 = vmatprep.subr.mxu0 0.0
        %859 = vmatpush1.xpose.msra.mxu0 0.0
        %860 = vmatprep.subr.mxu0 0.0
        %861 = vmatpush1.xpose.msra.mxu0 0.0
        %862 = vmatprep.subr.mxu0 0.0
        %863 = vmatpush1.xpose.msra.mxu0 0.0
        %864 = vmatprep.subr.mxu0 0.0
        %865 = vmatpush1.xpose.msra.mxu0 0.0
        %866 = vmatprep.subr.mxu0 0.0
        %867 = vmatpush1.xpose.msra.mxu0 0.0
        %868 = vmatprep.subr.mxu0 0.0
        %869 = vmatpush1.xpose.msra.mxu0 0.0
        %870 = vmatprep.subr.mxu0 0.0
        %871 = vmatpush1.xpose.msra.mxu0 0.0
        %872 = vmatprep.subr.mxu0 0.0
        %873 = vmatpush1.xpose.msra.mxu0 0.0
        %874 = vmatprep.subr.mxu0 0.0
        %875 = vmatpush1.xpose.msra.mxu0 0.0
        %876 = vmatprep.subr.mxu0 0.0
        %877 = vmatpush1.xpose.msra.mxu0 0.0
        %878 = vmatprep.subr.mxu0 0.0
        %879 = vmatpush1.xpose.msra.mxu0 0.0
        %880 = vmatprep.subr.mxu0 0.0
        %881 = vmatpush1.xpose.msra.mxu0 0.0
        %882 = vmatprep.subr.mxu0 0.0
        %883 = vmatpush1.xpose.msra.mxu0 0.0
        %884 = vmatprep.mubr.f32.mxu0 0.0
        %885 = vmatmul.mubr.f32.gmra.mrb[0].mxu0 %v816
        %v886 = vpop.f32.mrb[0].mxu0
        %v887 = vadd.f32 0.0, %v886
        %v888 = vpop.f32.mrb[0].mxu0
        %889 = vdwg.mxu0
        %v890 = vmul.f32 %v887, 0.35355338
        %v891 = vsel %vm725, -inf, %v890
        %v892 = vsel %vm647, %v891, -inf
        %893 = vmax.xlane.f32.xlu0 %v892
        %v894 = vpop.xlane.xlu0 %893
        %v895 = vsub.f32 %v891, %v894
        %v896 = vmul.f32 %v895, 1.442695
        %v897 = vpow.pop %v896
        %v898 = vsel %vm647, %v897, 0.0
        %899 = vadd.xlane.f32.xlu0 %v898
        %v900 = vpop.xlane.xlu0 %899
        %v901 = vrcp.pop %v900
        %v902 = vmul.f32 %v897, %v901
        %904 = vrot.lane.b32.xlu0 %v640, 120
        %v905 = vpop.permute.xlu0 %904
        %v908 = vsel %vm647, %v902, 0
        %910 = vmatprep.subr.mxu0 0.0
        %911 = vmatpush1.msra.mxu0 %v905
        %912 = vmatprep.subr.mxu0 0.0
        %913 = vmatpush1.msra.mxu0 0.0
        %914 = vmatprep.subr.mxu0 0.0
        %915 = vmatpush1.msra.mxu0 0.0
        %916 = vmatprep.subr.mxu0 0.0
        %917 = vmatpush1.msra.mxu0 0.0
        %918 = vmatprep.subr.mxu0 0.0
        %919 = vmatpush1.msra.mxu0 0.0
        %920 = vmatprep.subr.mxu0 0.0
        %921 = vmatpush1.msra.mxu0 0.0
        %922 = vmatprep.subr.mxu0 0.0
        %923 = vmatpush1.msra.mxu0 0.0
        %924 = vmatprep.subr.mxu0 0.0
        %925 = vmatpush1.msra.mxu0 0.0
        %926 = vmatprep.subr.mxu0 0.0
        %927 = vmatpush1.msra.mxu0 0.0
        %928 = vmatprep.subr.mxu0 0.0
        %929 = vmatpush1.msra.mxu0 0.0
        %930 = vmatprep.subr.mxu0 0.0
        %931 = vmatpush1.msra.mxu0 0.0
        %932 = vmatprep.subr.mxu0 0.0
        %933 = vmatpush1.msra.mxu0 0.0
        %934 = vmatprep.subr.mxu0 0.0
        %935 = vmatpush1.msra.mxu0 0.0
        %936 = vmatprep.subr.mxu0 0.0
        %937 = vmatpush1.msra.mxu0 0.0
        %938 = vmatprep.subr.mxu0 0.0
        %939 = vmatpush1.msra.mxu0 0.0
        %940 = vmatprep.subr.mxu0 0.0
        %941 = vmatpush1.msra.mxu0 0.0
        %942 = vmatprep.subr.mxu0 0.0
        %943 = vmatpush1.msra.mxu0 0.0
        %944 = vmatprep.subr.mxu0 0.0
        %945 = vmatpush1.msra.mxu0 0.0
        %946 = vmatprep.subr.mxu0 0.0
        %947 = vmatpush1.msra.mxu0 0.0
        %948 = vmatprep.subr.mxu0 0.0
        %949 = vmatpush1.msra.mxu0 0.0
        %950 = vmatprep.subr.mxu0 0.0
        %951 = vmatpush1.msra.mxu0 0.0
        %952 = vmatprep.subr.mxu0 0.0
        %953 = vmatpush1.msra.mxu0 0.0
        %954 = vmatprep.subr.mxu0 0.0
        %955 = vmatpush1.msra.mxu0 0.0
        %956 = vmatprep.subr.mxu0 0.0
        %957 = vmatpush1.msra.mxu0 0.0
        %958 = vmatprep.subr.mxu0 0.0
        %959 = vmatpush1.msra.mxu0 0.0
        %960 = vmatprep.subr.mxu0 0.0
        %961 = vmatpush1.msra.mxu0 0.0
        %962 = vmatprep.subr.mxu0 0.0
        %963 = vmatpush1.msra.mxu0 0.0
        %964 = vmatprep.subr.mxu0 0.0
        %965 = vmatpush1.msra.mxu0 0.0
        %966 = vmatprep.subr.mxu0 0.0
        %967 = vmatpush1.msra.mxu0 0.0
        %968 = vmatprep.subr.mxu0 0.0
        %969 = vmatpush1.msra.mxu0 0.0
        %970 = vmatprep.subr.mxu0 0.0
        %971 = vmatpush1.msra.mxu0 0.0
        %972 = vmatprep.subr.mxu0 0.0
        %973 = vmatpush1.msra.mxu0 0.0
        %974 = vmatprep.mubr.f32.mxu0 0.0
        %975 = vmatmul.mubr.f32.gmra.mrb[0].mxu0 %v908
        %v976 = vpop.f32.mrb[0].mxu0
        %v977 = vadd.f32 0.0, %v976
        %v978 = vpop.f32.mrb[0].mxu0
        %979 = vdwg.mxu0
        %v980 = vld [vmem:[#allocation10 + $0x8] sm:$0xff]
        %v982 = vsel %vm647, %v977, 0
        %984 = vmatprep.subr.mxu0 0.0
        %985 = vmatpush1.msra.mxu0 %v980
        %986 = vmatprep.subr.mxu0 0.0
        %987 = vmatpush1.msra.mxu0 0.0
        %988 = vmatprep.subr.mxu0 0.0
        %989 = vmatpush1.msra.mxu0 0.0
        %990 = vmatprep.subr.mxu0 0.0
        %991 = vmatpush1.msra.mxu0 0.0
        %992 = vmatprep.subr.mxu0 0.0
        %993 = vmatpush1.msra.mxu0 0.0
        %994 = vmatprep.subr.mxu0 0.0
        %995 = vmatpush1.msra.mxu0 0.0
        %996 = vmatprep.subr.mxu0 0.0
        %997 = vmatpush1.msra.mxu0 0.0
        %998 = vmatprep.subr.mxu0 0.0
        %999 = vmatpush1.msra.mxu0 0.0
        %1000 = vmatprep.subr.mxu0 0.0
        %1001 = vmatpush1.msra.mxu0 0.0
        %1002 = vmatprep.subr.mxu0 0.0
        %1003 = vmatpush1.msra.mxu0 0.0
        %1004 = vmatprep.subr.mxu0 0.0
        %1005 = vmatpush1.msra.mxu0 0.0
        %1006 = vmatprep.subr.mxu0 0.0
        %1007 = vmatpush1.msra.mxu0 0.0
        %1008 = vmatprep.subr.mxu0 0.0
        %1009 = vmatpush1.msra.mxu0 0.0
        %1010 = vmatprep.subr.mxu0 0.0
        %1011 = vmatpush1.msra.mxu0 0.0
        %1012 = vmatprep.subr.mxu0 0.0
        %1013 = vmatpush1.msra.mxu0 0.0
        %1014 = vmatprep.subr.mxu0 0.0
        %1015 = vmatpush1.msra.mxu0 0.0
        %1016 = vmatprep.subr.mxu0 0.0
        %1017 = vmatpush1.msra.mxu0 0.0
        %1018 = vmatprep.subr.mxu0 0.0
        %1019 = vmatpush1.msra.mxu0 0.0
        %1020 = vmatprep.subr.mxu0 0.0
        %1021 = vmatpush1.msra.mxu0 0.0
        %1022 = vmatprep.subr.mxu0 0.0
        %1023 = vmatpush1.msra.mxu0 0.0
        %1024 = vmatprep.subr.mxu0 0.0
        %1025 = vmatpush1.msra.mxu0 0.0
        %1026 = vmatprep.subr.mxu0 0.0
        %1027 = vmatpush1.msra.mxu0 0.0
        %1028 = vmatprep.subr.mxu0 0.0
        %1029 = vmatpush1.msra.mxu0 0.0
        %1030 = vmatprep.subr.mxu0 0.0
        %1031 = vmatpush1.msra.mxu0 0.0
        %1032 = vmatprep.subr.mxu0 0.0
        %1033 = vmatpush1.msra.mxu0 0.0
        %1034 = vmatprep.subr.mxu0 0.0
        %1035 = vmatpush1.msra.mxu0 0.0
        %1036 = vmatprep.subr.mxu0 0.0
        %1037 = vmatpush1.msra.mxu0 0.0
        %1038 = vmatprep.subr.mxu0 0.0
        %1039 = vmatpush1.msra.mxu0 0.0
        %1040 = vmatprep.subr.mxu0 0.0
        %1041 = vmatpush1.msra.mxu0 0.0
        %1042 = vmatprep.subr.mxu0 0.0
        %1043 = vmatpush1.msra.mxu0 0.0
        %1044 = vmatprep.subr.mxu0 0.0
        %1045 = vmatpush1.msra.mxu0 0.0
        %1046 = vmatprep.subr.mxu0 0.0
        %1047 = vmatpush1.msra.mxu0 0.0
        %1048 = vmatprep.mubr.f32.mxu0 0.0
        %1049 = vmatmul.mubr.f32.gmra.mrb[0].mxu0 %v982
        %v1050 = vpop.f32.mrb[0].mxu0
        %v1051 = vadd.f32 0.0, %v1050
        %v1052 = vpop.f32.mrb[0].mxu0
        %1053 = vdwg.mxu0
        %v1055 = vsel %vm647, %v808, 0
        %1057 = vmatprep.subr.mxu0 0.0
        %1058 = vmatpush1.msra.mxu0 %v811
        %1059 = vmatprep.subr.mxu0 0.0
        %1060 = vmatpush1.msra.mxu0 0.0
        %1061 = vmatprep.subr.mxu0 0.0
        %1062 = vmatpush1.msra.mxu0 0.0
        %1063 = vmatprep.subr.mxu0 0.0
        %1064 = vmatpush1.msra.mxu0 0.0
        %1065 = vmatprep.subr.mxu0 0.0
        %1066 = vmatpush1.msra.mxu0 0.0
        %1067 = vmatprep.subr.mxu0 0.0
        %1068 = vmatpush1.msra.mxu0 0.0
        %1069 = vmatprep.subr.mxu0 0.0
        %1070 = vmatpush1.msra.mxu0 0.0
        %1071 = vmatprep.subr.mxu0 0.0
        %1072 = vmatpush1.msra.mxu0 0.0
        %1073 = vmatprep.subr.mxu0 0.0
        %1074 = vmatpush1.msra.mxu0 0.0
        %1075 = vmatprep.subr.mxu0 0.0
        %1076 = vmatpush1.msra.mxu0 0.0
        %1077 = vmatprep.subr.mxu0 0.0
        %1078 = vmatpush1.msra.mxu0 0.0
        %1079 = vmatprep.subr.mxu0 0.0
        %1080 = vmatpush1.msra.mxu0 0.0
        %1081 = vmatprep.subr.mxu0 0.0
        %1082 = vmatpush1.msra.mxu0 0.0
        %1083 = vmatprep.subr.mxu0 0.0
        %1084 = vmatpush1.msra.mxu0 0.0
        %1085 = vmatprep.subr.mxu0 0.0
        %1086 = vmatpush1.msra.mxu0 0.0
        %1087 = vmatprep.subr.mxu0 0.0
        %1088 = vmatpush1.msra.mxu0 0.0
        %1089 = vmatprep.subr.mxu0 0.0
        %1090 = vmatpush1.msra.mxu0 0.0
        %1091 = vmatprep.subr.mxu0 0.0
        %1092 = vmatpush1.msra.mxu0 0.0
        %1093 = vmatprep.subr.mxu0 0.0
        %1094 = vmatpush1.msra.mxu0 0.0
        %1095 = vmatprep.subr.mxu0 0.0
        %1096 = vmatpush1.msra.mxu0 0.0
        %1097 = vmatprep.subr.mxu0 0.0
        %1098 = vmatpush1.msra.mxu0 0.0
        %1099 = vmatprep.subr.mxu0 0.0
        %1100 = vmatpush1.msra.mxu0 0.0
        %1101 = vmatprep.subr.mxu0 0.0
        %1102 = vmatpush1.msra.mxu0 0.0
        %1103 = vmatprep.subr.mxu0 0.0
        %1104 = vmatpush1.msra.mxu0 0.0
        %1105 = vmatprep.subr.mxu0 0.0
        %1106 = vmatpush1.msra.mxu0 0.0
        %1107 = vmatprep.subr.mxu0 0.0
        %1108 = vmatpush1.msra.mxu0 0.0
        %1109 = vmatprep.subr.mxu0 0.0
        %1110 = vmatpush1.msra.mxu0 0.0
        %1111 = vmatprep.subr.mxu0 0.0
        %1112 = vmatpush1.msra.mxu0 0.0
        %1113 = vmatprep.subr.mxu0 0.0
        %1114 = vmatpush1.msra.mxu0 0.0
        %1115 = vmatprep.subr.mxu0 0.0
        %1116 = vmatpush1.msra.mxu0 0.0
        %1117 = vmatprep.subr.mxu0 0.0
        %1118 = vmatpush1.msra.mxu0 0.0
        %1119 = vmatprep.subr.mxu0 0.0
        %1120 = vmatpush1.msra.mxu0 0.0
        %1121 = vmatprep.mubr.f32.mxu0 0.0
        %1122 = vmatmul.mubr.f32.gmra.mrb[0].mxu0 %v1055
        %v1123 = vpop.f32.mrb[0].mxu0
        %v1124 = vadd.f32 %v1051, %v1123
        %v1125 = vpop.f32.mrb[0].mxu0
        %1126 = vdwg.mxu0
        %1127 = vrot.lane.b32.xlu0 %v492, 112
        %v1128 = vpop.permute.xlu0 %1127
        %1129 = vrot.lane.b32.xlu0 %v566, 112
        %v1130 = vpop.permute.xlu0 %1129
        %v1131 = vsel %vm647, %v1128, 0
        %v1133 = vsel %vm647, %v1130, 0
        %1135 = vmatprep.subr.mxu0 0.0
        %1136 = vmatpush1.xpose.msra.mxu0 %v1133
        %1137 = vmatprep.subr.mxu0 0.0
        %1138 = vmatpush1.xpose.msra.mxu0 0.0
        %1139 = vmatprep.subr.mxu0 0.0
        %1140 = vmatpush1.xpose.msra.mxu0 0.0
        %1141 = vmatprep.subr.mxu0 0.0
        %1142 = vmatpush1.xpose.msra.mxu0 0.0
        %1143 = vmatprep.subr.mxu0 0.0
        %1144 = vmatpush1.xpose.msra.mxu0 0.0
        %1145 = vmatprep.subr.mxu0 0.0
        %1146 = vmatpush1.xpose.msra.mxu0 0.0
        %1147 = vmatprep.subr.mxu0 0.0
        %1148 = vmatpush1.xpose.msra.mxu0 0.0
        %1149 = vmatprep.subr.mxu0 0.0
        %1150 = vmatpush1.xpose.msra.mxu0 0.0
        %1151 = vmatprep.subr.mxu0 0.0
        %1152 = vmatpush1.xpose.msra.mxu0 0.0
        %1153 = vmatprep.subr.mxu0 0.0
        %1154 = vmatpush1.xpose.msra.mxu0 0.0
        %1155 = vmatprep.subr.mxu0 0.0
        %1156 = vmatpush1.xpose.msra.mxu0 0.0
        %1157 = vmatprep.subr.mxu0 0.0
        %1158 = vmatpush1.xpose.msra.mxu0 0.0
        %1159 = vmatprep.subr.mxu0 0.0
        %1160 = vmatpush1.xpose.msra.mxu0 0.0
        %1161 = vmatprep.subr.mxu0 0.0
        %1162 = vmatpush1.xpose.msra.mxu0 0.0
        %1163 = vmatprep.subr.mxu0 0.0
        %1164 = vmatpush1.xpose.msra.mxu0 0.0
        %1165 = vmatprep.subr.mxu0 0.0
        %1166 = vmatpush1.xpose.msra.mxu0 0.0
        %1167 = vmatprep.subr.mxu0 0.0
        %1168 = vmatpush1.xpose.msra.mxu0 0.0
        %1169 = vmatprep.subr.mxu0 0.0
        %1170 = vmatpush1.xpose.msra.mxu0 0.0
        %1171 = vmatprep.subr.mxu0 0.0
        %1172 = vmatpush1.xpose.msra.mxu0 0.0
        %1173 = vmatprep.subr.mxu0 0.0
        %1174 = vmatpush1.xpose.msra.mxu0 0.0
        %1175 = vmatprep.subr.mxu0 0.0
        %1176 = vmatpush1.xpose.msra.mxu0 0.0
        %1177 = vmatprep.subr.mxu0 0.0
        %1178 = vmatpush1.xpose.msra.mxu0 0.0
        %1179 = vmatprep.subr.mxu0 0.0
        %1180 = vmatpush1.xpose.msra.mxu0 0.0
        %1181 = vmatprep.subr.mxu0 0.0
        %1182 = vmatpush1.xpose.msra.mxu0 0.0
        %1183 = vmatprep.subr.mxu0 0.0
        %1184 = vmatpush1.xpose.msra.mxu0 0.0
        %1185 = vmatprep.subr.mxu0 0.0
        %1186 = vmatpush1.xpose.msra.mxu0 0.0
        %1187 = vmatprep.subr.mxu0 0.0
        %1188 = vmatpush1.xpose.msra.mxu0 0.0
        %1189 = vmatprep.subr.mxu0 0.0
        %1190 = vmatpush1.xpose.msra.mxu0 0.0
        %1191 = vmatprep.subr.mxu0 0.0
        %1192 = vmatpush1.xpose.msra.mxu0 0.0
        %1193 = vmatprep.subr.mxu0 0.0
        %1194 = vmatpush1.xpose.msra.mxu0 0.0
        %1195 = vmatprep.subr.mxu0 0.0
        %1196 = vmatpush1.xpose.msra.mxu0 0.0
        %1197 = vmatprep.subr.mxu0 0.0
        %1198 = vmatpush1.xpose.msra.mxu0 0.0
        %1199 = vmatprep.mubr.f32.mxu0 0.0
        %1200 = vmatmul.mubr.f32.gmra.mrb[0].mxu0 %v1131
        %v1201 = vpop.f32.mrb[0].mxu0
        %v1202 = vadd.f32 0.0, %v1201
        %v1203 = vpop.f32.mrb[0].mxu0
        %1204 = vdwg.mxu0
        %v1205 = vmul.f32 %v1202, 0.35355338
        %v1206 = vsel %vm725, -inf, %v1205
        %v1207 = vsel %vm647, %v1206, -inf
        %1208 = vmax.xlane.f32.xlu0 %v1207
        %v1209 = vpop.xlane.xlu0 %1208
        %v1210 = vsub.f32 %v1206, %v1209
        %v1211 = vmul.f32 %v1210, 1.442695
        %v1212 = vpow.pop %v1211
        %v1213 = vsel %vm647, %v1212, 0.0
        %1214 = vadd.xlane.f32.xlu0 %v1213
        %v1215 = vpop.xlane.xlu0 %1214
        %v1216 = vrcp.pop %v1215
        %v1217 = vmul.f32 %v1212, %v1216
        %1218 = vrot.lane.b32.xlu0 %v640, 112
        %v1219 = vpop.permute.xlu0 %1218
        %v1222 = vsel %vm647, %v1217, 0
        %1224 = vmatprep.subr.mxu0 0.0
        %1225 = vmatpush1.msra.mxu0 %v1219
        %1226 = vmatprep.subr.mxu0 0.0
        %1227 = vmatpush1.msra.mxu0 0.0
        %1228 = vmatprep.subr.mxu0 0.0
        %1229 = vmatpush1.msra.mxu0 0.0
        %1230 = vmatprep.subr.mxu0 0.0
        %1231 = vmatpush1.msra.mxu0 0.0
        %1232 = vmatprep.subr.mxu0 0.0
        %1233 = vmatpush1.msra.mxu0 0.0
        %1234 = vmatprep.subr.mxu0 0.0
        %1235 = vmatpush1.msra.mxu0 0.0
        %1236 = vmatprep.subr.mxu0 0.0
        %1237 = vmatpush1.msra.mxu0 0.0
        %1238 = vmatprep.subr.mxu0 0.0
        %1239 = vmatpush1.msra.mxu0 0.0
        %1240 = vmatprep.subr.mxu0 0.0
        %1241 = vmatpush1.msra.mxu0 0.0
        %1242 = vmatprep.subr.mxu0 0.0
        %1243 = vmatpush1.msra.mxu0 0.0
        %1244 = vmatprep.subr.mxu0 0.0
        %1245 = vmatpush1.msra.mxu0 0.0
        %1246 = vmatprep.subr.mxu0 0.0
        %1247 = vmatpush1.msra.mxu0 0.0
        %1248 = vmatprep.subr.mxu0 0.0
        %1249 = vmatpush1.msra.mxu0 0.0
        %1250 = vmatprep.subr.mxu0 0.0
        %1251 = vmatpush1.msra.mxu0 0.0
        %1252 = vmatprep.subr.mxu0 0.0
        %1253 = vmatpush1.msra.mxu0 0.0
        %1254 = vmatprep.subr.mxu0 0.0
        %1255 = vmatpush1.msra.mxu0 0.0
        %1256 = vmatprep.subr.mxu0 0.0
        %1257 = vmatpush1.msra.mxu0 0.0
        %1258 = vmatprep.subr.mxu0 0.0
        %1259 = vmatpush1.msra.mxu0 0.0
        %1260 = vmatprep.subr.mxu0 0.0
        %1261 = vmatpush1.msra.mxu0 0.0
        %1262 = vmatprep.subr.mxu0 0.0
        %1263 = vmatpush1.msra.mxu0 0.0
        %1264 = vmatprep.subr.mxu0 0.0
        %1265 = vmatpush1.msra.mxu0 0.0
        %1266 = vmatprep.subr.mxu0 0.0
        %1267 = vmatpush1.msra.mxu0 0.0
        %1268 = vmatprep.subr.mxu0 0.0
        %1269 = vmatpush1.msra.mxu0 0.0
        %1270 = vmatprep.subr.mxu0 0.0
        %1271 = vmatpush1.msra.mxu0 0.0
        %1272 = vmatprep.subr.mxu0 0.0
        %1273 = vmatpush1.msra.mxu0 0.0
        %1274 = vmatprep.subr.mxu0 0.0
        %1275 = vmatpush1.msra.mxu0 0.0
        %1276 = vmatprep.subr.mxu0 0.0
        %1277 = vmatpush1.msra.mxu0 0.0
        %1278 = vmatprep.subr.mxu0 0.0
        %1279 = vmatpush1.msra.mxu0 0.0
        %1280 = vmatprep.subr.mxu0 0.0
        %1281 = vmatpush1.msra.mxu0 0.0
        %1282 = vmatprep.subr.mxu0 0.0
        %1283 = vmatpush1.msra.mxu0 0.0
        %1284 = vmatprep.subr.mxu0 0.0
        %1285 = vmatpush1.msra.mxu0 0.0
        %1286 = vmatprep.subr.mxu0 0.0
        %1287 = vmatpush1.msra.mxu0 0.0
        %1288 = vmatprep.mubr.f32.mxu0 0.0
        %1289 = vmatmul.mubr.f32.gmra.mrb[0].mxu0 %v1222
        %v1290 = vpop.f32.mrb[0].mxu0
        %v1291 = vadd.f32 0.0, %v1290
        %v1292 = vpop.f32.mrb[0].mxu0
        %1293 = vdwg.mxu0
        %v1294 = vld [vmem:[#allocation10 + $0x10] sm:$0xff]
        %v1296 = vsel %vm647, %v1291, 0
        %1298 = vmatprep.subr.mxu0 0.0
        %1299 = vmatpush1.msra.mxu0 %v1294
        %1300 = vmatprep.subr.mxu0 0.0
        %1301 = vmatpush1.msra.mxu0 0.0
        %1302 = vmatprep.subr.mxu0 0.0
        %1303 = vmatpush1.msra.mxu0 0.0
        %1304 = vmatprep.subr.mxu0 0.0
        %1305 = vmatpush1.msra.mxu0 0.0
        %1306 = vmatprep.subr.mxu0 0.0
        %1307 = vmatpush1.msra.mxu0 0.0
        %1308 = vmatprep.subr.mxu0 0.0
        %1309 = vmatpush1.msra.mxu0 0.0
        %1310 = vmatprep.subr.mxu0 0.0
        %1311 = vmatpush1.msra.mxu0 0.0
        %1312 = vmatprep.subr.mxu0 0.0
        %1313 = vmatpush1.msra.mxu0 0.0
        %1314 = vmatprep.subr.mxu0 0.0
        %1315 = vmatpush1.msra.mxu0 0.0
        %1316 = vmatprep.subr.mxu0 0.0
        %1317 = vmatpush1.msra.mxu0 0.0
        %1318 = vmatprep.subr.mxu0 0.0
        %1319 = vmatpush1.msra.mxu0 0.0
        %1320 = vmatprep.subr.mxu0 0.0
        %1321 = vmatpush1.msra.mxu0 0.0
        %1322 = vmatprep.subr.mxu0 0.0
        %1323 = vmatpush1.msra.mxu0 0.0
        %1324 = vmatprep.subr.mxu0 0.0
        %1325 = vmatpush1.msra.mxu0 0.0
        %1326 = vmatprep.subr.mxu0 0.0
        %1327 = vmatpush1.msra.mxu0 0.0
        %1328 = vmatprep.subr.mxu0 0.0
        %1329 = vmatpush1.msra.mxu0 0.0
        %1330 = vmatprep.subr.mxu0 0.0
        %1331 = vmatpush1.msra.mxu0 0.0
        %1332 = vmatprep.subr.mxu0 0.0
        %1333 = vmatpush1.msra.mxu0 0.0
        %1334 = vmatprep.subr.mxu0 0.0
        %1335 = vmatpush1.msra.mxu0 0.0
        %1336 = vmatprep.subr.mxu0 0.0
        %1337 = vmatpush1.msra.mxu0 0.0
        %1338 = vmatprep.subr.mxu0 0.0
        %1339 = vmatpush1.msra.mxu0 0.0
        %1340 = vmatprep.subr.mxu0 0.0
        %1341 = vmatpush1.msra.mxu0 0.0
        %1342 = vmatprep.subr.mxu0 0.0
        %1343 = vmatpush1.msra.mxu0 0.0
        %1344 = vmatprep.subr.mxu0 0.0
        %1345 = vmatpush1.msra.mxu0 0.0
        %1346 = vmatprep.subr.mxu0 0.0
        %1347 = vmatpush1.msra.mxu0 0.0
        %1348 = vmatprep.subr.mxu0 0.0
        %1349 = vmatpush1.msra.mxu0 0.0
        %1350 = vmatprep.subr.mxu0 0.0
        %1351 = vmatpush1.msra.mxu0 0.0
        %1352 = vmatprep.subr.mxu0 0.0
        %1353 = vmatpush1.msra.mxu0 0.0
        %1354 = vmatprep.subr.mxu0 0.0
        %1355 = vmatpush1.msra.mxu0 0.0
        %1356 = vmatprep.subr.mxu0 0.0
        %1357 = vmatpush1.msra.mxu0 0.0
        %1358 = vmatprep.subr.mxu0 0.0
        %1359 = vmatpush1.msra.mxu0 0.0
        %1360 = vmatprep.subr.mxu0 0.0
        %1361 = vmatpush1.msra.mxu0 0.0
        %1362 = vmatprep.mubr.f32.mxu0 0.0
        %1363 = vmatmul.mubr.f32.gmra.mrb[0].mxu0 %v1296
        %v1364 = vpop.f32.mrb[0].mxu0
        %v1365 = vadd.f32 0.0, %v1364
        %v1366 = vpop.f32.mrb[0].mxu0
        %1367 = vdwg.mxu0
        %v1368 = vadd.f32 %v1124, %v1365
        %1369 = vrot.lane.b32.xlu0 %v492, 104
        %v1370 = vpop.permute.xlu0 %1369
        %1371 = vrot.lane.b32.xlu0 %v566, 104
        %v1372 = vpop.permute.xlu0 %1371
        %v1373 = vsel %vm647, %v1370, 0
        %v1375 = vsel %vm647, %v1372, 0
        %1377 = vmatprep.subr.mxu0 0.0
        %1378 = vmatpush1.xpose.msra.mxu0 %v1375
        %1379 = vmatprep.subr.mxu0 0.0
        %1380 = vmatpush1.xpose.msra.mxu0 0.0
        %1381 = vmatprep.subr.mxu0 0.0
        %1382 = vmatpush1.xpose.msra.mxu0 0.0
        %1383 = vmatprep.subr.mxu0 0.0
        %1384 = vmatpush1.xpose.msra.mxu0 0.0
        %1385 = vmatprep.subr.mxu0 0.0
        %1386 = vmatpush1.xpose.msra.mxu0 0.0
        %1387 = vmatprep.subr.mxu0 0.0
        %1388 = vmatpush1.xpose.msra.mxu0 0.0
        %1389 = vmatprep.subr.mxu0 0.0
        %1390 = vmatpush1.xpose.msra.mxu0 0.0
        %1391 = vmatprep.subr.mxu0 0.0
        %1392 = vmatpush1.xpose.msra.mxu0 0.0
        %1393 = vmatprep.subr.mxu0 0.0
        %1394 = vmatpush1.xpose.msra.mxu0 0.0
        %1395 = vmatprep.subr.mxu0 0.0
        %1396 = vmatpush1.xpose.msra.mxu0 0.0
        %1397 = vmatprep.subr.mxu0 0.0
        %1398 = vmatpush1.xpose.msra.mxu0 0.0
        %1399 = vmatprep.subr.mxu0 0.0
        %1400 = vmatpush1.xpose.msra.mxu0 0.0
        %1401 = vmatprep.subr.mxu0 0.0
        %1402 = vmatpush1.xpose.msra.mxu0 0.0
        %1403 = vmatprep.subr.mxu0 0.0
        %1404 = vmatpush1.xpose.msra.mxu0 0.0
        %1405 = vmatprep.subr.mxu0 0.0
        %1406 = vmatpush1.xpose.msra.mxu0 0.0
        %1407 = vmatprep.subr.mxu0 0.0
        %1408 = vmatpush1.xpose.msra.mxu0 0.0
        %1409 = vmatprep.subr.mxu0 0.0
        %1410 = vmatpush1.xpose.msra.mxu0 0.0
        %1411 = vmatprep.subr.mxu0 0.0
        %1412 = vmatpush1.xpose.msra.mxu0 0.0
        %1413 = vmatprep.subr.mxu0 0.0
        %1414 = vmatpush1.xpose.msra.mxu0 0.0
        %1415 = vmatprep.subr.mxu0 0.0
        %1416 = vmatpush1.xpose.msra.mxu0 0.0
        %1417 = vmatprep.subr.mxu0 0.0
        %1418 = vmatpush1.xpose.msra.mxu0 0.0
        %1419 = vmatprep.subr.mxu0 0.0
        %1420 = vmatpush1.xpose.msra.mxu0 0.0
        %1421 = vmatprep.subr.mxu0 0.0
        %1422 = vmatpush1.xpose.msra.mxu0 0.0
        %1423 = vmatprep.subr.mxu0 0.0
        %1424 = vmatpush1.xpose.msra.mxu0 0.0
        %1425 = vmatprep.subr.mxu0 0.0
        %1426 = vmatpush1.xpose.msra.mxu0 0.0
        %1427 = vmatprep.subr.mxu0 0.0
        %1428 = vmatpush1.xpose.msra.mxu0 0.0
        %1429 = vmatprep.subr.mxu0 0.0
        %1430 = vmatpush1.xpose.msra.mxu0 0.0
        %1431 = vmatprep.subr.mxu0 0.0
        %1432 = vmatpush1.xpose.msra.mxu0 0.0
        %1433 = vmatprep.subr.mxu0 0.0
        %1434 = vmatpush1.xpose.msra.mxu0 0.0
        %1435 = vmatprep.subr.mxu0 0.0
        %1436 = vmatpush1.xpose.msra.mxu0 0.0
        %1437 = vmatprep.subr.mxu0 0.0
        %1438 = vmatpush1.xpose.msra.mxu0 0.0
        %1439 = vmatprep.subr.mxu0 0.0
        %1440 = vmatpush1.xpose.msra.mxu0 0.0
        %1441 = vmatprep.mubr.f32.mxu0 0.0
        %1442 = vmatmul.mubr.f32.gmra.mrb[0].mxu0 %v1373
        %v1443 = vpop.f32.mrb[0].mxu0
        %v1444 = vadd.f32 0.0, %v1443
        %v1445 = vpop.f32.mrb[0].mxu0
        %1446 = vdwg.mxu0
        %v1447 = vmul.f32 %v1444, 0.35355338
        %v1448 = vsel %vm725, -inf, %v1447
        %v1449 = vsel %vm647, %v1448, -inf
        %1450 = vmax.xlane.f32.xlu0 %v1449
        %v1451 = vpop.xlane.xlu0 %1450
        %v1452 = vsub.f32 %v1448, %v1451
        %v1453 = vmul.f32 %v1452, 1.442695
        %v1454 = vpow.pop %v1453
        %v1455 = vsel %vm647, %v1454, 0.0
        %1456 = vadd.xlane.f32.xlu0 %v1455
        %v1457 = vpop.xlane.xlu0 %1456
        %v1458 = vrcp.pop %v1457
        %v1459 = vmul.f32 %v1454, %v1458
        %1460 = vrot.lane.b32.xlu0 %v640, 104
        %v1461 = vpop.permute.xlu0 %1460
        %v1464 = vsel %vm647, %v1459, 0
        %1466 = vmatprep.subr.mxu0 0.0
        %1467 = vmatpush1.msra.mxu0 %v1461
        %1468 = vmatprep.subr.mxu0 0.0
        %1469 = vmatpush1.msra.mxu0 0.0
        %1470 = vmatprep.subr.mxu0 0.0
        %1471 = vmatpush1.msra.mxu0 0.0
        %1472 = vmatprep.subr.mxu0 0.0
        %1473 = vmatpush1.msra.mxu0 0.0
        %1474 = vmatprep.subr.mxu0 0.0
        %1475 = vmatpush1.msra.mxu0 0.0
        %1476 = vmatprep.subr.mxu0 0.0
        %1477 = vmatpush1.msra.mxu0 0.0
        %1478 = vmatprep.subr.mxu0 0.0
        %1479 = vmatpush1.msra.mxu0 0.0
        %1480 = vmatprep.subr.mxu0 0.0
        %1481 = vmatpush1.msra.mxu0 0.0
        %1482 = vmatprep.subr.mxu0 0.0
        %1483 = vmatpush1.msra.mxu0 0.0
        %1484 = vmatprep.subr.mxu0 0.0
        %1485 = vmatpush1.msra.mxu0 0.0
        %1486 = vmatprep.subr.mxu0 0.0
        %1487 = vmatpush1.msra.mxu0 0.0
        %1488 = vmatprep.subr.mxu0 0.0
        %1489 = vmatpush1.msra.mxu0 0.0
        %1490 = vmatprep.subr.mxu0 0.0
        %1491 = vmatpush1.msra.mxu0 0.0
        %1492 = vmatprep.subr.mxu0 0.0
        %1493 = vmatpush1.msra.mxu0 0.0
        %1494 = vmatprep.subr.mxu0 0.0
        %1495 = vmatpush1.msra.mxu0 0.0
        %1496 = vmatprep.subr.mxu0 0.0
        %1497 = vmatpush1.msra.mxu0 0.0
        %1498 = vmatprep.subr.mxu0 0.0
        %1499 = vmatpush1.msra.mxu0 0.0
        %1500 = vmatprep.subr.mxu0 0.0
        %1501 = vmatpush1.msra.mxu0 0.0
        %1502 = vmatprep.subr.mxu0 0.0
        %1503 = vmatpush1.msra.mxu0 0.0
        %1504 = vmatprep.subr.mxu0 0.0
        %1505 = vmatpush1.msra.mxu0 0.0
        %1506 = vmatprep.subr.mxu0 0.0
        %1507 = vmatpush1.msra.mxu0 0.0
        %1508 = vmatprep.subr.mxu0 0.0
        %1509 = vmatpush1.msra.mxu0 0.0
        %1510 = vmatprep.subr.mxu0 0.0
        %1511 = vmatpush1.msra.mxu0 0.0
        %1512 = vmatprep.subr.mxu0 0.0
        %1513 = vmatpush1.msra.mxu0 0.0
        %1514 = vmatprep.subr.mxu0 0.0
        %1515 = vmatpush1.msra.mxu0 0.0
        %1516 = vmatprep.subr.mxu0 0.0
        %1517 = vmatpush1.msra.mxu0 0.0
        %1518 = vmatprep.subr.mxu0 0.0
        %1519 = vmatpush1.msra.mxu0 0.0
        %1520 = vmatprep.subr.mxu0 0.0
        %1521 = vmatpush1.msra.mxu0 0.0
        %1522 = vmatprep.subr.mxu0 0.0
        %1523 = vmatpush1.msra.mxu0 0.0
        %1524 = vmatprep.subr.mxu0 0.0
        %1525 = vmatpush1.msra.mxu0 0.0
        %1526 = vmatprep.subr.mxu0 0.0
        %1527 = vmatpush1.msra.mxu0 0.0
        %1528 = vmatprep.subr.mxu0 0.0
        %1529 = vmatpush1.msra.mxu0 0.0
        %1530 = vmatprep.mubr.f32.mxu0 0.0
        %1531 = vmatmul.mubr.f32.gmra.mrb[0].mxu0 %v1464
        %v1532 = vpop.f32.mrb[0].mxu0
        %v1533 = vadd.f32 0.0, %v1532
        %v1534 = vpop.f32.mrb[0].mxu0
        %1535 = vdwg.mxu0
        %v1536 = vld [vmem:[#allocation10 + $0x18] sm:$0xff]
        %v1538 = vsel %vm647, %v1533, 0
        %1540 = vmatprep.subr.mxu0 0.0
        %1541 = vmatpush1.msra.mxu0 %v1536
        %1542 = vmatprep.subr.mxu0 0.0
        %1543 = vmatpush1.msra.mxu0 0.0
        %1544 = vmatprep.subr.mxu0 0.0
        %1545 = vmatpush1.msra.mxu0 0.0
        %1546 = vmatprep.subr.mxu0 0.0
        %1547 = vmatpush1.msra.mxu0 0.0
        %1548 = vmatprep.subr.mxu0 0.0
        %1549 = vmatpush1.msra.mxu0 0.0
        %1550 = vmatprep.subr.mxu0 0.0
        %1551 = vmatpush1.msra.mxu0 0.0
        %1552 = vmatprep.subr.mxu0 0.0
        %1553 = vmatpush1.msra.mxu0 0.0
        %1554 = vmatprep.subr.mxu0 0.0
        %1555 = vmatpush1.msra.mxu0 0.0
        %1556 = vmatprep.subr.mxu0 0.0
        %1557 = vmatpush1.msra.mxu0 0.0
        %1558 = vmatprep.subr.mxu0 0.0
        %1559 = vmatpush1.msra.mxu0 0.0
        %1560 = vmatprep.subr.mxu0 0.0
        %1561 = vmatpush1.msra.mxu0 0.0
        %1562 = vmatprep.subr.mxu0 0.0
        %1563 = vmatpush1.msra.mxu0 0.0
        %1564 = vmatprep.subr.mxu0 0.0
        %1565 = vmatpush1.msra.mxu0 0.0
        %1566 = vmatprep.subr.mxu0 0.0
        %1567 = vmatpush1.msra.mxu0 0.0
        %1568 = vmatprep.subr.mxu0 0.0
        %1569 = vmatpush1.msra.mxu0 0.0
        %1570 = vmatprep.subr.mxu0 0.0
        %1571 = vmatpush1.msra.mxu0 0.0
        %1572 = vmatprep.subr.mxu0 0.0
        %1573 = vmatpush1.msra.mxu0 0.0
        %1574 = vmatprep.subr.mxu0 0.0
        %1575 = vmatpush1.msra.mxu0 0.0
        %1576 = vmatprep.subr.mxu0 0.0
        %1577 = vmatpush1.msra.mxu0 0.0
        %1578 = vmatprep.subr.mxu0 0.0
        %1579 = vmatpush1.msra.mxu0 0.0
        %1580 = vmatprep.subr.mxu0 0.0
        %1581 = vmatpush1.msra.mxu0 0.0
        %1582 = vmatprep.subr.mxu0 0.0
        %1583 = vmatpush1.msra.mxu0 0.0
        %1584 = vmatprep.subr.mxu0 0.0
        %1585 = vmatpush1.msra.mxu0 0.0
        %1586 = vmatprep.subr.mxu0 0.0
        %1587 = vmatpush1.msra.mxu0 0.0
        %1588 = vmatprep.subr.mxu0 0.0
        %1589 = vmatpush1.msra.mxu0 0.0
        %1590 = vmatprep.subr.mxu0 0.0
        %1591 = vmatpush1.msra.mxu0 0.0
        %1592 = vmatprep.subr.mxu0 0.0
        %1593 = vmatpush1.msra.mxu0 0.0
        %1594 = vmatprep.subr.mxu0 0.0
        %1595 = vmatpush1.msra.mxu0 0.0
        %1596 = vmatprep.subr.mxu0 0.0
        %1597 = vmatpush1.msra.mxu0 0.0
        %1598 = vmatprep.subr.mxu0 0.0
        %1599 = vmatpush1.msra.mxu0 0.0
        %1600 = vmatprep.subr.mxu0 0.0
        %1601 = vmatpush1.msra.mxu0 0.0
        %1602 = vmatprep.subr.mxu0 0.0
        %1603 = vmatpush1.msra.mxu0 0.0
        %1604 = vmatprep.mubr.f32.mxu0 0.0
        %1605 = vmatmul.mubr.f32.gmra.mrb[0].mxu0 %v1538
        %v1606 = vpop.f32.mrb[0].mxu0
        %v1607 = vadd.f32 0.0, %v1606
        %v1608 = vpop.f32.mrb[0].mxu0
        %1609 = vdwg.mxu0
        %v1610 = vadd.f32 %v1368, %v1607
        %v1611 = vld [vmem:[%s7] sm:$0x1]
        %v1613 = vlaneseq
        %v1614 = vshrl.u32 %v1613, 7
        %v1615 = vsub.s32 0, %v1614
        %v1616 = vrot.slane %v1611, %v1615
        %v1618 = vadd.f32 %v1610, %v1616
        %v1619 = vadd.f32 %v1618, %v379
        %1620 = vst.msk [vmem:[%s378] sm:$0xff] %vm380, %v1619
        %s1621 = sand.u32 %s208, 1
        %s1622 = scalar_lea.sflag [#allocation4], %s1621
        %s1623 = sand.u32 %s208, 1
        %s1624 = smul.addr %s1623, 8
        %s1625 = scalar_lea.vmem [#allocation11], %s1624
        // Predicated region
        $region73: #{tpu_custom_call.1} parent=51 // pred_check
          %p1626 = pneg %p218
        $region74: #{tpu_custom_call.1} parent=51 // pred_check_branch
          %1628 = sbr.rel (%p1626) target = $region76
        $region75: #{tpu_custom_call.1} parent=51 // pred_region
          %s1630 = ssub.s32 128, 128
          %1631 = vsyncadd %s1622, %s1630
          %s1632 = smul.addr %s27, 128
          %s1633 = scalar_lea.hbm %s8, %s1632
          %s1635 = sshll.u32 %s1625, 4
          %s1636 = int_to_ptr.vmem [resolvable:$true] %s1635
          %1638 = dma.vmem_to_hbm [thread:$0]  %s1636, 128, %s1633, %s1622
        $region76: #{tpu_custom_call.1} parent=51 // pred_fallthru
          _
      $region52: #{tpu_custom_call.1} parent=5 // pred_fallthru
        _
      %p1639 = scmp.le.s32.totalorder 2, %s22
      // Predicated region
      $region77: #{tpu_custom_call.1} parent=5 // pred_check
        %p1640 = pneg %p1639
      $region78: #{tpu_custom_call.1} parent=5 // pred_check_branch
        %1642 = sbr.rel (%p1640) target = $region80
      $region79: #{tpu_custom_call.1} parent=5 // pred_region
        %s1643 = ssub.s32 %s22, 2
        // Predicated region
        $region81: #{tpu_custom_call.1} parent=79 // pred_check
          %p1644 = pneg %p224
        $region82: #{tpu_custom_call.1} parent=79 // pred_check_branch
          %1646 = sbr.rel (%p1644) target = $region84
        $region83: #{tpu_custom_call.1} parent=79 // pred_region
          %s1647 = sand.u32 %s209, 1
          %s1648 = scalar_lea.sflag [#allocation4], %s1647
          %s1649 = sand.u32 %s209, 1
          %s1650 = smul.addr %s1649, 8
          %s1651 = scalar_lea.vmem [#allocation11], %s1650
          %1652 = dma.done %s1648, 128
        $region84: #{tpu_custom_call.1} parent=79 // pred_fallthru
          _
      $region80: #{tpu_custom_call.1} parent=5 // pred_fallthru
        _
    $region6: #{tpu_custom_call.1} parent=1 // loop_footer
      %s26 = sadd.s32 1, %s22
    $region7: #{tpu_custom_call.1} parent=1 // loop_footer_branch
      %21 = sbr.rel target = $region3
    $region8: #{tpu_custom_call.1} parent=1 // loop_exit
      _
    %1653 = vsyncpa [#allocation3], 1
    %s1654 = scalar_lea.sflag [#allocation3], 1
    %1655 = vsyncpa %s1654, 1
    %1656 = vsyncpa [#allocation6], 1
    %1657 = vsyncpa [#allocation9], 1
    %1658 = vsyncpa [#allocation4], 1
    %s1659 = scalar_lea.sflag [#allocation4], 1
    %1660 = vsyncpa %s1659, 1

</llo_original>
